<compile_context>
chip_gen: v6e
topology: v6e:2x2x1
jax: 0.10.0
libtpu: 0.0.40
codegen_flags: <defaults>
</compile_context>

<pallas_src>
import functools

import jax
import jax.numpy as jnp
from jax.experimental import pallas as pl
from jax.experimental.pallas import tpu as pltpu

BN_EPS = 1e-5


# --------------------------------------------------------------------------
# Block-Toeplitz weight construction (wrapper / init side, tiny)
# --------------------------------------------------------------------------
def _toeplitz_conv_weights(w9, w_in, w_out, stride, dtype):
    """(9, Cin, Cout) tap-major 3x3 weights -> (3, w_in*Cin, w_out*Cout) slabs.

    Slab dy is the matmul weight for a whole conv row: output column block x_o
    receives tap (dy, dx) at input column block x_i = stride*x_o + dx - 1.
    Taps falling outside [0, w_in) are dropped, which implements the column
    halo (padding=1) with zero activation padding.
    """
    cin, cout = w9.shape[1], w9.shape[2]
    xi = jnp.arange(w_in)[:, None, None]
    xo = jnp.arange(w_out)[None, :, None]
    dx = jnp.arange(3)[None, None, :]
    mask = (xi == stride * xo + dx - 1).astype(jnp.float32)     # (w_in, w_out, 3)
    w = w9.reshape(3, 3, cin, cout).astype(jnp.float32)         # (dy, dx, i, c)
    t = jnp.einsum('xod,ydic->yxioc', mask, w)                  # exact placement
    return t.reshape(3, w_in * cin, w_out * cout).astype(dtype)


def _toeplitz_shortcut_weights(ws, w_in, w_out, stride, dtype):
    """(Cin, Cout) 1x1-conv weights -> (w_in*Cin, w_out*Cout) strided block-diag."""
    cin, cout = ws.shape
    xi = jnp.arange(w_in)[:, None]
    xo = jnp.arange(w_out)[None, :]
    mask = (xi == stride * xo).astype(jnp.float32)
    t = jnp.einsum('xo,ic->xioc', mask, ws.astype(jnp.float32))
    return t.reshape(w_in * cin, w_out * cout).astype(dtype)


def _fold_bn(bn, w_out):
    scale, shift = bn     # per-channel folded BN (f32)
    return jnp.tile(scale, w_out)[None, :], jnp.tile(shift, w_out)[None, :]


# --------------------------------------------------------------------------
# Fused BasicBlock kernel (one batch image per grid step)
# --------------------------------------------------------------------------
def _basic_block_kernel(*refs, H, W, Cout, stride, shortcut_conv):
    it = iter(refs)
    x_ref = next(it)
    t1_ref, s1_ref, b1_ref = next(it), next(it), next(it)
    t2_ref, s2_ref, b2_ref = next(it), next(it), next(it)
    if shortcut_conv:
        ts_ref, ss_ref, bs_ref = next(it), next(it), next(it)
    o_ref = next(it)

    f32 = jnp.float32
    Ho = H // stride
    N = (W // stride) * Cout

    # lane-dense row-padded input: (H+2, W*Cin) bf16
    x2d = x_ref[0]

    # ---- conv1 + BN1 + ReLU: 3 contiguous-row-slab matmuls (one per dy) ----
    if stride == 1:
        slabs = (x2d[0:Ho], x2d[1:Ho + 1], x2d[2:Ho + 2])
    else:
        # wrapper pre-split the padded rows into even / odd phases:
        # rows [0:Ho+1] = even padded rows, rows [Ho+1:] = odd padded rows,
        # so every strided tap row is still a contiguous slab.
        slabs = (x2d[0:Ho], x2d[Ho + 1:2 * Ho + 1], x2d[1:Ho + 1])

    acc1 = jnp.zeros((Ho, N), f32)
    for dy in range(3):
        acc1 = acc1 + jnp.dot(slabs[dy], t1_ref[dy], preferred_element_type=f32)
    y1 = jnp.maximum(acc1 * s1_ref[...] + b1_ref[...], 0.0)        # (Ho, N) f32

    # ---- conv2 + BN2: intermediate stays on-chip, lane-dense ----
    # row halo = two zero rows; column halo already folded into t2.
    zrow = jnp.zeros((1, N), f32)
    y1p = jnp.concatenate([zrow, y1, zrow], axis=0)                # (Ho+2, N)
    acc2 = jnp.zeros((Ho, N), f32)
    for dy in range(3):
        acc2 = acc2 + jnp.dot(y1p[dy:dy + Ho].astype(x2d.dtype), t2_ref[dy],
                              preferred_element_type=f32)
    y2 = acc2 * s2_ref[...] + b2_ref[...]

    # ---- shortcut + residual add + final ReLU (fused epilogue) ----
    if shortcut_conv:
        sc_in = x2d[1:Ho + 1] if stride == 1 else x2d[Ho + 1:2 * Ho + 1]
        sc = jnp.dot(sc_in, ts_ref[...], preferred_element_type=f32)
        sc = sc * ss_ref[...] + bs_ref[...]
    else:
        sc = x2d[1:Ho + 1].astype(f32)     # identity shortcut (unpadded rows)

    o_ref[0] = jnp.maximum(y2 + sc, 0.0).astype(o_ref.dtype)


# --------------------------------------------------------------------------
# Wrappers
# --------------------------------------------------------------------------
def basic_block_forward_nhwc(p, x_nhwc):
    """BasicBlock forward, NHWC in / NHWC out (bf16).

    This is the layout a full network should stay in; only the model's
    entry/exit should transpose (see the NCHW shim below).
    """
    stride = p['stride']
    B, H, W, Cin = x_nhwc.shape
    Cout = p['w1'].shape[-1]
    assert H % stride == 0 and W % stride == 0, "stride-2 requires even H, W"
    Ho, Wo = H // stride, W // stride
    K1, N = W * Cin, Wo * Cout
    shortcut_conv = (stride != 1) or (Cin != Cout)
    bf16 = jnp.bfloat16

    # lane-dense rows (W*Cin lanes) + 1-row halo; stride 2 additionally splits
    # the padded rows into even/odd phases so every tap row is contiguous.
    x = x_nhwc.astype(bf16)
    xp = jnp.pad(x, ((0, 0), (1, 1), (0, 0), (0, 0)))
    if stride == 2:
        xp = jnp.concatenate([xp[:, 0::2], xp[:, 1::2]], axis=1)
    x_in = xp.reshape(B, H + 2, K1)

    t1 = _toeplitz_conv_weights(p['w1'], W, Wo, stride, bf16)
    t2 = _toeplitz_conv_weights(p['w2'], Wo, Wo, 1, bf16)
    s1, b1 = _fold_bn(p['bn1'], Wo)
    s2, b2 = _fold_bn(p['bn2'], Wo)

    args = [x_in, t1, s1, b1, t2, s2, b2]
    in_specs = [
        pl.BlockSpec((1, H + 2, K1), lambda b: (b, 0, 0)),
        pl.BlockSpec((3, K1, N), lambda b: (0, 0, 0)),
        pl.BlockSpec((1, N), lambda b: (0, 0)),
        pl.BlockSpec((1, N), lambda b: (0, 0)),
        pl.BlockSpec((3, N, N), lambda b: (0, 0, 0)),
        pl.BlockSpec((1, N), lambda b: (0, 0)),
        pl.BlockSpec((1, N), lambda b: (0, 0)),
    ]
    flops = 2 * B * Ho * (3 * K1 * N + 3 * N * N)
    if shortcut_conv:
        ts = _toeplitz_shortcut_weights(p['ws'], W, Wo, stride, bf16)
        ss, bs = _fold_bn(p['bns'], Wo)
        args += [ts, ss, bs]
        in_specs += [
            pl.BlockSpec((K1, N), lambda b: (0, 0)),
            pl.BlockSpec((1, N), lambda b: (0, 0)),
            pl.BlockSpec((1, N), lambda b: (0, 0)),
        ]
        flops += 2 * B * Ho * K1 * N

    bytes_accessed = (sum(int(a.size) * a.dtype.itemsize for a in args)
                      + B * Ho * N * 2)

    kern = functools.partial(_basic_block_kernel, H=H, W=W, Cout=Cout,
                             stride=stride, shortcut_conv=shortcut_conv)
    out = pl.pallas_call(
        kern,
        out_shape=jax.ShapeDtypeStruct((B, Ho, N), bf16),     # lane-dense, bf16
        grid=(B,),
        in_specs=in_specs,
        out_specs=pl.BlockSpec((1, Ho, N), lambda b: (b, 0, 0)),
        compiler_params=pltpu.CompilerParams(
            dimension_semantics=("parallel",)),
        cost_estimate=pl.CostEstimate(flops=flops, transcendentals=0,
                                      bytes_accessed=bytes_accessed),
    )(*args)
    return out.reshape(B, Ho, Wo, Cout)


def basic_block_forward(p, x_nchw):
    """NCHW shim kept only for parity with the PyTorch module interface.
    In a full network, chain basic_block_forward_nhwc directly to avoid
    per-block HBM transpose passes."""
    x = jnp.transpose(x_nchw, (0, 2, 3, 1))
    y = basic_block_forward_nhwc(p, x)
    return jnp.transpose(y, (0, 3, 1, 2))


# --------------------------------------------------------------------------
# Parameter init (BN folded with running stats) and pure-JAX reference
# --------------------------------------------------------------------------
def _he(key, shape, fan_in):
    return jax.random.normal(key, shape, jnp.float32) * jnp.sqrt(2.0 / fan_in)


def _make_bn(key, c):
    k1, k2, k3, k4 = jax.random.split(key, 4)
    gamma = 1.0 + 0.1 * jax.random.normal(k1, (c,), jnp.float32)
    beta = 0.1 * jax.random.normal(k2, (c,), jnp.float32)
    rmean = 0.1 * jax.random.normal(k3, (c,), jnp.float32)
    rvar = 1.0 + 0.1 * jax.random.uniform(k4, (c,), jnp.float32)
    scale = gamma / jnp.sqrt(rvar + BN_EPS)
    shift = beta - rmean * scale
    return scale, shift


def init_basic_block(key, in_planes, planes, stride):
    keys = jax.random.split(key, 6)
    # conv weights tap-major: w[dy*3+dx, cin, cout] == torch_weight[cout, cin, dy, dx]
    p = {
        'stride': stride,
        'w1': _he(keys[0], (9, in_planes, planes), 9 * in_planes),
        'bn1': _make_bn(keys[1], planes),
        'w2': _he(keys[2], (9, planes, planes), 9 * planes),
        'bn2': _make_bn(keys[3], planes),
    }
    if stride != 1 or in_planes != planes:
        p['ws'] = _he(keys[4], (in_planes, planes), in_planes)
        p['bns'] = _make_bn(keys[5], planes)
    return p


def basic_block_reference(p, x_nchw):
    """lax.conv reference with the same bf16 rounding points as the kernel."""
    stride = p['stride']
    x = jnp.transpose(x_nchw, (0, 2, 3, 1)).astype(jnp.bfloat16).astype(jnp.float32)
    Cin = x.shape[-1]
    Cout = p['w1'].shape[-1]
    dn = ('NHWC', 'HWIO', 'NHWC')

    def conv(v, w, s, pad):
        w = w.astype(jnp.bfloat16).astype(jnp.float32)   # kernel weights are bf16
        return jax.lax.conv_general_dilated(
            v, w, (s, s), pad, dimension_numbers=dn,
            precision=jax.lax.Precision.HIGHEST)

    s1, b1 = p['bn1']
    s2, b2 = p['bn2']
    out = conv(x, p['w1'].reshape(3, 3, Cin, Cout), stride, ((1, 1), (1, 1)))
    out = jnp.maximum(out * s1 + b1, 0.0)
    out = out.astype(jnp.bfloat16).astype(jnp.float32)   # kernel mid is bf16
    out = conv(out, p['w2'].reshape(3, 3, Cout, Cout), 1, ((1, 1), (1, 1)))
    out = out * s2 + b2
    if 'ws' in p:
        ss, bs = p['bns']
        sc = conv(x, p['ws'].reshape(1, 1, Cin, Cout), stride, ((0, 0), (0, 0)))
        sc = sc * ss + bs
    else:
        sc = x
    out = jnp.maximum(out + sc, 0.0)
    return jnp.transpose(out, (0, 3, 1, 2))


if __name__ == "__main__":
    key = jax.random.PRNGKey(0)
    kp1, kp2, kx = jax.random.split(key, 3)
    # small CIFAR-style shapes: batch=2, channels=16, spatial=16 (NCHW)
    x = jax.random.normal(kx, (2, 16, 16, 16), jnp.float32)

    configs = [
        (init_basic_block(kp1, 16, 32, stride=2), (2, 32, 8, 8)),   # 1x1-conv shortcut
        (init_basic_block(kp2, 16, 16, stride=1), (2, 16, 16, 16)), # identity shortcut
    ]
    for p, shp in configs:
        fwd = jax.jit(lambda inp, p=p: basic_block_forward(p, inp))
        y = fwd(x)
        jax.block_until_ready(y)
        assert y.shape == shp, (y.shape, shp)
        y32 = y.astype(jnp.float32)
        assert bool(jnp.all(jnp.isfinite(y32)))
        y_ref = basic_block_reference(p, x)
        rel_err = jnp.max(jnp.abs(y32 - y_ref)) / (jnp.max(jnp.abs(y_ref)) + 1e-6)
        assert float(rel_err) < 2e-2, float(rel_err)

    print("KERNEL_OK")
</pallas_src>

<mosaic_0001>
module attributes {stable_mosaic.version = 11 : i64} {
  func.func @_basic_block_kernel(%arg0: i32, %arg1: memref<1x18x256xbf16, #tpu.memory_space<vmem>>, %arg2: memref<3x256x256xbf16, #tpu.memory_space<vmem>>, %arg3: memref<1x256xf32, #tpu.memory_space<vmem>>, %arg4: memref<1x256xf32, #tpu.memory_space<vmem>>, %arg5: memref<3x256x256xbf16, #tpu.memory_space<vmem>>, %arg6: memref<1x256xf32, #tpu.memory_space<vmem>>, %arg7: memref<1x256xf32, #tpu.memory_space<vmem>>, %arg8: memref<256x256xbf16, #tpu.memory_space<vmem>>, %arg9: memref<1x256xf32, #tpu.memory_space<vmem>>, %arg10: memref<1x256xf32, #tpu.memory_space<vmem>>, %arg11: memref<1x8x256xbf16, #tpu.memory_space<vmem>>) attributes {dimension_semantics = [#tpu.dimension_semantics<parallel>], iteration_bounds = array<i64: 2>, scalar_prefetch = 0 : i64, scratch_operands = 0 : i64, tpu.core_type = #tpu.core_type<tc>, window_params = [{transform_indices = @transform_0, window_bounds = array<i64: 1, 18, 256>}, {pipeline_mode = #tpu.pipeline_mode<synchronous>, transform_indices = @transform_1, window_bounds = array<i64: 3, 256, 256>}, {pipeline_mode = #tpu.pipeline_mode<synchronous>, transform_indices = @transform_2, window_bounds = array<i64: 1, 256>}, {pipeline_mode = #tpu.pipeline_mode<synchronous>, transform_indices = @transform_3, window_bounds = array<i64: 1, 256>}, {pipeline_mode = #tpu.pipeline_mode<synchronous>, transform_indices = @transform_4, window_bounds = array<i64: 3, 256, 256>}, {pipeline_mode = #tpu.pipeline_mode<synchronous>, transform_indices = @transform_5, window_bounds = array<i64: 1, 256>}, {pipeline_mode = #tpu.pipeline_mode<synchronous>, transform_indices = @transform_6, window_bounds = array<i64: 1, 256>}, {pipeline_mode = #tpu.pipeline_mode<synchronous>, transform_indices = @transform_7, window_bounds = array<i64: 256, 256>}, {pipeline_mode = #tpu.pipeline_mode<synchronous>, transform_indices = @transform_8, window_bounds = array<i64: 1, 256>}, {pipeline_mode = #tpu.pipeline_mode<synchronous>, transform_indices = @transform_9, window_bounds = array<i64: 1, 256>}, {transform_indices = @transform_10, window_bounds = array<i64: 1, 8, 256>}]} {
    %c0 = arith.constant 0 : index
    %c0_0 = arith.constant 0 : index
    %c0_1 = arith.constant 0 : index
    %0 = vector.load %arg1[%c0, %c0_0, %c0_1] : memref<1x18x256xbf16, #tpu.memory_space<vmem>>, vector<1x18x256xbf16>
    %1 = vector.shape_cast %0 : vector<1x18x256xbf16> to vector<18x256xbf16>
    %2 = vector.extract_strided_slice %1 {offsets = [0, 0], sizes = [8, 256], strides = [1, 1]} : vector<18x256xbf16> to vector<8x256xbf16>
    %3 = vector.extract_strided_slice %1 {offsets = [9, 0], sizes = [8, 256], strides = [1, 1]} : vector<18x256xbf16> to vector<8x256xbf16>
    %4 = vector.extract_strided_slice %1 {offsets = [1, 0], sizes = [8, 256], strides = [1, 1]} : vector<18x256xbf16> to vector<8x256xbf16>
    %cst = arith.constant 0.000000e+00 : f32
    %5 = vector.broadcast %cst : f32 to vector<8x256xf32>
    %c0_2 = arith.constant 0 : index
    %c0_3 = arith.constant 0 : index
    %c0_4 = arith.constant 0 : index
    %6 = vector.load %arg2[%c0_2, %c0_3, %c0_4] : memref<3x256x256xbf16, #tpu.memory_space<vmem>>, vector<1x256x256xbf16>
    %7 = vector.shape_cast %6 : vector<1x256x256xbf16> to vector<256x256xbf16>
    %cst_5 = arith.constant dense<0.000000e+00> : vector<8x256xf32>
    %8 = tpu.matmul %2, %7, %cst_5 {dimension_numbers = #tpu.dot_dimension_numbers<[1], [0], [0], [1], [0, 0, 1, 1], [], []>} : vector<8x256xbf16>, vector<256x256xbf16>, vector<8x256xf32> -> vector<8x256xf32>
    %9 = arith.addf %5, %8 : vector<8x256xf32>
    %c1 = arith.constant 1 : index
    %c0_6 = arith.constant 0 : index
    %c0_7 = arith.constant 0 : index
    %10 = vector.load %arg2[%c1, %c0_6, %c0_7] : memref<3x256x256xbf16, #tpu.memory_space<vmem>>, vector<1x256x256xbf16>
    %11 = vector.shape_cast %10 : vector<1x256x256xbf16> to vector<256x256xbf16>
    %cst_8 = arith.constant dense<0.000000e+00> : vector<8x256xf32>
    %12 = tpu.matmul %3, %11, %cst_8 {dimension_numbers = #tpu.dot_dimension_numbers<[1], [0], [0], [1], [0, 0, 1, 1], [], []>} : vector<8x256xbf16>, vector<256x256xbf16>, vector<8x256xf32> -> vector<8x256xf32>
    %13 = arith.addf %9, %12 : vector<8x256xf32>
    %c2 = arith.constant 2 : index
    %c0_9 = arith.constant 0 : index
    %c0_10 = arith.constant 0 : index
    %14 = vector.load %arg2[%c2, %c0_9, %c0_10] : memref<3x256x256xbf16, #tpu.memory_space<vmem>>, vector<1x256x256xbf16>
    %15 = vector.shape_cast %14 : vector<1x256x256xbf16> to vector<256x256xbf16>
    %cst_11 = arith.constant dense<0.000000e+00> : vector<8x256xf32>
    %16 = tpu.matmul %4, %15, %cst_11 {dimension_numbers = #tpu.dot_dimension_numbers<[1], [0], [0], [1], [0, 0, 1, 1], [], []>} : vector<8x256xbf16>, vector<256x256xbf16>, vector<8x256xf32> -> vector<8x256xf32>
    %17 = arith.addf %13, %16 : vector<8x256xf32>
    %c0_12 = arith.constant 0 : index
    %c0_13 = arith.constant 0 : index
    %18 = vector.load %arg3[%c0_12, %c0_13] : memref<1x256xf32, #tpu.memory_space<vmem>>, vector<1x256xf32>
    %19 = vector.broadcast %18 : vector<1x256xf32> to vector<8x256xf32>
    %20 = arith.mulf %17, %19 : vector<8x256xf32>
    %c0_14 = arith.constant 0 : index
    %c0_15 = arith.constant 0 : index
    %21 = vector.load %arg4[%c0_14, %c0_15] : memref<1x256xf32, #tpu.memory_space<vmem>>, vector<1x256xf32>
    %22 = vector.broadcast %21 : vector<1x256xf32> to vector<8x256xf32>
    %23 = arith.addf %20, %22 : vector<8x256xf32>
    %cst_16 = arith.constant 0.000000e+00 : f32
    %24 = vector.broadcast %cst_16 : f32 to vector<8x256xf32>
    %25 = arith.maximumf %23, %24 : vector<8x256xf32>
    %cst_17 = arith.constant 0.000000e+00 : f32
    %26 = vector.broadcast %cst_17 : f32 to vector<1x256xf32>
    %27 = tpu.concatenate %26, %25, %26 in 0 : vector<1x256xf32>, vector<8x256xf32>, vector<1x256xf32> -> vector<10x256xf32>
    %cst_18 = arith.constant 0.000000e+00 : f32
    %28 = vector.broadcast %cst_18 : f32 to vector<8x256xf32>
    %29 = vector.extract_strided_slice %27 {offsets = [0, 0], sizes = [8, 256], strides = [1, 1]} : vector<10x256xf32> to vector<8x256xf32>
    %30 = arith.truncf %29 : vector<8x256xf32> to vector<8x256xbf16>
    %c0_19 = arith.constant 0 : index
    %c0_20 = arith.constant 0 : index
    %c0_21 = arith.constant 0 : index
    %31 = vector.load %arg5[%c0_19, %c0_20, %c0_21] : memref<3x256x256xbf16, #tpu.memory_space<vmem>>, vector<1x256x256xbf16>
    %32 = vector.shape_cast %31 : vector<1x256x256xbf16> to vector<256x256xbf16>
    %cst_22 = arith.constant dense<0.000000e+00> : vector<8x256xf32>
    %33 = tpu.matmul %30, %32, %cst_22 {dimension_numbers = #tpu.dot_dimension_numbers<[1], [0], [0], [1], [0, 0, 1, 1], [], []>} : vector<8x256xbf16>, vector<256x256xbf16>, vector<8x256xf32> -> vector<8x256xf32>
    %34 = arith.addf %28, %33 : vector<8x256xf32>
    %35 = vector.extract_strided_slice %27 {offsets = [1, 0], sizes = [8, 256], strides = [1, 1]} : vector<10x256xf32> to vector<8x256xf32>
    %36 = arith.truncf %35 : vector<8x256xf32> to vector<8x256xbf16>
    %c1_23 = arith.constant 1 : index
    %c0_24 = arith.constant 0 : index
    %c0_25 = arith.constant 0 : index
    %37 = vector.load %arg5[%c1_23, %c0_24, %c0_25] : memref<3x256x256xbf16, #tpu.memory_space<vmem>>, vector<1x256x256xbf16>
    %38 = vector.shape_cast %37 : vector<1x256x256xbf16> to vector<256x256xbf16>
    %cst_26 = arith.constant dense<0.000000e+00> : vector<8x256xf32>
    %39 = tpu.matmul %36, %38, %cst_26 {dimension_numbers = #tpu.dot_dimension_numbers<[1], [0], [0], [1], [0, 0, 1, 1], [], []>} : vector<8x256xbf16>, vector<256x256xbf16>, vector<8x256xf32> -> vector<8x256xf32>
    %40 = arith.addf %34, %39 : vector<8x256xf32>
    %41 = vector.extract_strided_slice %27 {offsets = [2, 0], sizes = [8, 256], strides = [1, 1]} : vector<10x256xf32> to vector<8x256xf32>
    %42 = arith.truncf %41 : vector<8x256xf32> to vector<8x256xbf16>
    %c2_27 = arith.constant 2 : index
    %c0_28 = arith.constant 0 : index
    %c0_29 = arith.constant 0 : index
    %43 = vector.load %arg5[%c2_27, %c0_28, %c0_29] : memref<3x256x256xbf16, #tpu.memory_space<vmem>>, vector<1x256x256xbf16>
    %44 = vector.shape_cast %43 : vector<1x256x256xbf16> to vector<256x256xbf16>
    %cst_30 = arith.constant dense<0.000000e+00> : vector<8x256xf32>
    %45 = tpu.matmul %42, %44, %cst_30 {dimension_numbers = #tpu.dot_dimension_numbers<[1], [0], [0], [1], [0, 0, 1, 1], [], []>} : vector<8x256xbf16>, vector<256x256xbf16>, vector<8x256xf32> -> vector<8x256xf32>
    %46 = arith.addf %40, %45 : vector<8x256xf32>
    %c0_31 = arith.constant 0 : index
    %c0_32 = arith.constant 0 : index
    %47 = vector.load %arg6[%c0_31, %c0_32] : memref<1x256xf32, #tpu.memory_space<vmem>>, vector<1x256xf32>
    %48 = vector.broadcast %47 : vector<1x256xf32> to vector<8x256xf32>
    %49 = arith.mulf %46, %48 : vector<8x256xf32>
    %c0_33 = arith.constant 0 : index
    %c0_34 = arith.constant 0 : index
    %50 = vector.load %arg7[%c0_33, %c0_34] : memref<1x256xf32, #tpu.memory_space<vmem>>, vector<1x256xf32>
    %51 = vector.broadcast %50 : vector<1x256xf32> to vector<8x256xf32>
    %52 = arith.addf %49, %51 : vector<8x256xf32>
    %53 = vector.extract_strided_slice %1 {offsets = [9, 0], sizes = [8, 256], strides = [1, 1]} : vector<18x256xbf16> to vector<8x256xbf16>
    %c0_35 = arith.constant 0 : index
    %c0_36 = arith.constant 0 : index
    %54 = vector.load %arg8[%c0_35, %c0_36] : memref<256x256xbf16, #tpu.memory_space<vmem>>, vector<256x256xbf16>
    %cst_37 = arith.constant dense<0.000000e+00> : vector<8x256xf32>
    %55 = tpu.matmul %53, %54, %cst_37 {dimension_numbers = #tpu.dot_dimension_numbers<[1], [0], [0], [1], [0, 0, 1, 1], [], []>} : vector<8x256xbf16>, vector<256x256xbf16>, vector<8x256xf32> -> vector<8x256xf32>
    %c0_38 = arith.constant 0 : index
    %c0_39 = arith.constant 0 : index
    %56 = vector.load %arg9[%c0_38, %c0_39] : memref<1x256xf32, #tpu.memory_space<vmem>>, vector<1x256xf32>
    %57 = vector.broadcast %56 : vector<1x256xf32> to vector<8x256xf32>
    %58 = arith.mulf %55, %57 : vector<8x256xf32>
    %c0_40 = arith.constant 0 : index
    %c0_41 = arith.constant 0 : index
    %59 = vector.load %arg10[%c0_40, %c0_41] : memref<1x256xf32, #tpu.memory_space<vmem>>, vector<1x256xf32>
    %60 = vector.broadcast %59 : vector<1x256xf32> to vector<8x256xf32>
    %61 = arith.addf %58, %60 : vector<8x256xf32>
    %62 = arith.addf %52, %61 : vector<8x256xf32>
    %cst_42 = arith.constant 0.000000e+00 : f32
    %63 = vector.broadcast %cst_42 : f32 to vector<8x256xf32>
    %64 = arith.maximumf %62, %63 : vector<8x256xf32>
    %65 = arith.truncf %64 : vector<8x256xf32> to vector<8x256xbf16>
    %c0_43 = arith.constant 0 : index
    %c0_44 = arith.constant 0 : index
    %c0_45 = arith.constant 0 : index
    %66 = vector.load %arg11[%c0_43, %c0_44, %c0_45] : memref<1x8x256xbf16, #tpu.memory_space<vmem>>, vector<1x8x256xbf16>
    %67 = vector.shape_cast %66 : vector<1x8x256xbf16> to vector<8x256xbf16>
    %68 = vector.shape_cast %65 : vector<8x256xbf16> to vector<1x8x256xbf16>
    tpu.vector_store %arg11[%c0_43, %c0_44, %c0_45], %68 {strides = array<i32>} : memref<1x8x256xbf16, #tpu.memory_space<vmem>>, vector<1x8x256xbf16>,
    return
  }
  func.func @transform_0(%arg0: i32) -> (i32, i32, i32) {
    %c0_i32 = arith.constant 0 : i32
    %c0_i32_0 = arith.constant 0 : i32
    %c0_i32_1 = arith.constant 0 : i32
    return %arg0, %c0_i32, %c0_i32_0 : i32, i32, i32
  }
  func.func @transform_1(%arg0: i32) -> (i32, i32, i32) {
    %c0_i32 = arith.constant 0 : i32
    %c0_i32_0 = arith.constant 0 : i32
    %c0_i32_1 = arith.constant 0 : i32
    %c0_i32_2 = arith.constant 0 : i32
    return %c0_i32, %c0_i32_0, %c0_i32_1 : i32, i32, i32
  }
  func.func @transform_2(%arg0: i32) -> (i32, i32) {
    %c0_i32 = arith.constant 0 : i32
    %c0_i32_0 = arith.constant 0 : i32
    %c0_i32_1 = arith.constant 0 : i32
    return %c0_i32, %c0_i32_0 : i32, i32
  }
  func.func @transform_3(%arg0: i32) -> (i32, i32) {
    %c0_i32 = arith.constant 0 : i32
    %c0_i32_0 = arith.constant 0 : i32
    %c0_i32_1 = arith.constant 0 : i32
    return %c0_i32, %c0_i32_0 : i32, i32
  }
  func.func @transform_4(%arg0: i32) -> (i32, i32, i32) {
    %c0_i32 = arith.constant 0 : i32
    %c0_i32_0 = arith.constant 0 : i32
    %c0_i32_1 = arith.constant 0 : i32
    %c0_i32_2 = arith.constant 0 : i32
    return %c0_i32, %c0_i32_0, %c0_i32_1 : i32, i32, i32
  }
  func.func @transform_5(%arg0: i32) -> (i32, i32) {
    %c0_i32 = arith.constant 0 : i32
    %c0_i32_0 = arith.constant 0 : i32
    %c0_i32_1 = arith.constant 0 : i32
    return %c0_i32, %c0_i32_0 : i32, i32
  }
  func.func @transform_6(%arg0: i32) -> (i32, i32) {
    %c0_i32 = arith.constant 0 : i32
    %c0_i32_0 = arith.constant 0 : i32
    %c0_i32_1 = arith.constant 0 : i32
    return %c0_i32, %c0_i32_0 : i32, i32
  }
  func.func @transform_7(%arg0: i32) -> (i32, i32) {
    %c0_i32 = arith.constant 0 : i32
    %c0_i32_0 = arith.constant 0 : i32
    %c0_i32_1 = arith.constant 0 : i32
    return %c0_i32, %c0_i32_0 : i32, i32
  }
  func.func @transform_8(%arg0: i32) -> (i32, i32) {
    %c0_i32 = arith.constant 0 : i32
    %c0_i32_0 = arith.constant 0 : i32
    %c0_i32_1 = arith.constant 0 : i32
    return %c0_i32, %c0_i32_0 : i32, i32
  }
  func.func @transform_9(%arg0: i32) -> (i32, i32) {
    %c0_i32 = arith.constant 0 : i32
    %c0_i32_0 = arith.constant 0 : i32
    %c0_i32_1 = arith.constant 0 : i32
    return %c0_i32, %c0_i32_0 : i32, i32
  }
  func.func @transform_10(%arg0: i32) -> (i32, i32, i32) {
    %c0_i32 = arith.constant 0 : i32
    %c0_i32_0 = arith.constant 0 : i32
    %c0_i32_1 = arith.constant 0 : i32
    return %arg0, %c0_i32, %c0_i32_0 : i32, i32, i32
  }
}

</mosaic_0001>

<llo_original>
// kernel: tile.26
$region0: #{tile.26}
  #allocation0 [shape = 's32[1]{0}', space=sflag, size = 0x4, scoped, tag = 'scoped memory for tile.26']
  %s0 = inlined_call_operand.vmem [shape: f32[32], index: 0, kind: input, shape index: {}]
  %s1 = inlined_call_operand.vmem [shape: f32[8,32], index: 1, kind: output, shape index: {}]
  // Predicated region
  $region2: #{tile.26} parent=0 // pred_check
    _
  $region3: #{tile.26} parent=0 // pred_check_branch
    %3 = sbr.rel (0) target = $region5
  $region4: #{tile.26} parent=0 // pred_region
    _
  $region5: #{tile.26} parent=0 // pred_fallthru
    _
  %v4 = vld [vmem:[%s0] ss:$0 sm:$0xff]
  %5 = vst [vmem:[%s1] sm:$0xff] %v4

// kernel: tile.27
$region0: #{tile.27}
  %s0 = inlined_call_operand.vmem [shape: f32[8,32], index: 0, kind: input, shape index: {}]
  %s1 = inlined_call_operand.vmem [shape: f32[1,256], index: 1, kind: output, shape index: {}]
  $region1: #{tile.27} parent=0
    #allocation0 [shape = 'u8[8192]{0}', space=vmem, size = 0x2000, scoped, tag = 'scoped mem for output reshape']
    %s2 = smov 3
    %v3 = vld [vmem:[%s0] ss:$4 sm:%s2]
    %vm4 = vcmask 261120
    %5 = vst.msk [vmem:[#allocation0] ss:$8 sm:$0x3] %vm4, %v3
    %s6 = scalar_lea.vmem %s0, 3
    %s7 = smov 3
    %v8 = vld [vmem:[%s6] ss:$4 sm:%s7]
    %9 = vrot.lane.b32.xlu0 %v8, 96
    %v10 = vpop.permute.xlu0 %9
    %vm11 = vcmask 1048320
    %12 = vst.msk [vmem:[#allocation0] ss:$8 sm:$0x3] %vm11, %v10
    %s13 = scalar_lea.vmem %s0, 2
    %s14 = smov 3
    %v15 = vld [vmem:[%s13] ss:$4 sm:%s14]
    %16 = vrot.lane.b32.xlu0 %v15, 64
    %v17 = vpop.permute.xlu0 %16
    %vm18 = vcmask 785920
    %19 = vst.msk [vmem:[#allocation0] ss:$8 sm:$0x3] %vm18, %v17
    %s20 = scalar_lea.vmem %s0, 1
    %s21 = smov 3
    %v22 = vld [vmem:[%s20] ss:$4 sm:%s21]
    %23 = vrot.lane.b32.xlu0 %v22, 32
    %v24 = vpop.permute.xlu0 %23
    %vm25 = vcmask 523520
    %26 = vst.msk [vmem:[#allocation0] ss:$8 sm:$0x3] %vm25, %v24
    %s28 = sshll.u32 1, 1
    %s29 = ssub.s32 %s28, 1
    %v31 = vld [vmem:[#allocation0] sm:%s29]
    %s32 = sshll.u32 1, 1
    %s33 = ssub.s32 %s32, 1
    %34 = vst [vmem:[%s1] sm:%s33] %v31
    %s35 = scalar_lea.vmem [#allocation0], 8
    %v36 = vld [vmem:[%s35] sm:%s29]
    %s37 = sshll.u32 1, 1
    %s38 = ssub.s32 %s37, 1
    %s39 = scalar_lea.vmem %s1, 1
    %40 = vst [vmem:[%s39] sm:%s38] %v36

// kernel: _lambda_.1
$region0: #{_lambda_.1}
  #allocation0 [shape = 'u32[]', space=smem, size = 0x4, offset = 0x4, fixed_abs, tag = 'smem constant byte address 0x4 - core index']
  #allocation1 [shape = 'u32[144,128]{1,0:T(1,128)}', space=vmem, size = 0x12000, scoped, tag = 'internal scratch']
  %s0 = inlined_call_operand.vmem [shape: bf16[2,18,256], index: 0, kind: input, shape index: {}]
  %s1 = inlined_call_operand.vmem [shape: bf16[3,256,256], index: 1, kind: input, shape index: {}]
  %s2 = inlined_call_operand.vmem [shape: f32[1,256], index: 2, kind: input, shape index: {}]
  %s3 = inlined_call_operand.vmem [shape: f32[1,256], index: 3, kind: input, shape index: {}]
  %s4 = inlined_call_operand.vmem [shape: bf16[3,256,256], index: 4, kind: input, shape index: {}]
  %s5 = inlined_call_operand.vmem [shape: f32[1,256], index: 5, kind: input, shape index: {}]
  %s6 = inlined_call_operand.vmem [shape: f32[1,256], index: 6, kind: input, shape index: {}]
  %s7 = inlined_call_operand.vmem [shape: bf16[256,256], index: 7, kind: input, shape index: {}]
  %s8 = inlined_call_operand.vmem [shape: f32[1,256], index: 8, kind: input, shape index: {}]
  %s9 = inlined_call_operand.vmem [shape: f32[1,256], index: 9, kind: input, shape index: {}]
  %s10 = inlined_call_operand.vmem [shape: bf16[2,8,256], index: 10, kind: output, shape index: {}]
  %s11 = sld [smem:[#allocation0]]
  $region73: #{_lambda_.1} parent=0
    _
  %s13 = ssub.s32 1, %s11
  %s14 = scalar_select 0, %s13, %s11
  loop: start=0, step=1, limit=4
  $region2: #{_lambda_.1} parent=0 // loop_pre_header
    _
  $region3: #{_lambda_.1} parent=0 // loop_header
    %s16 = sphi 0, %s20
    %p17 = scmp.ge.s32.totalorder %s16, 4
    %s26 = sphi 0, %s28
    %s29 = sphi 0, %s26
    %s30 = sphi 0, %s29
    %s46 = sphi 0, %s30
    %s50 = sphi 0, %s50
    %s52 = sphi 0, %s50
    %s53 = sphi 0, %s52
    %s67 = sphi 0, %s53
    %s71 = sphi 0, %s71
    %s73 = sphi 0, %s71
    %s74 = sphi 0, %s73
    %s88 = sphi 0, %s74
    %s92 = sphi 0, %s92
    %s94 = sphi 0, %s92
    %s95 = sphi 0, %s94
    %s109 = sphi 0, %s95
    %s113 = sphi 0, %s113
    %s115 = sphi 0, %s113
    %s116 = sphi 0, %s115
    %s130 = sphi 0, %s116
    %s134 = sphi 0, %s134
    %s136 = sphi 0, %s134
    %s137 = sphi 0, %s136
    %s151 = sphi 0, %s137
    %s155 = sphi 0, %s155
    %s157 = sphi 0, %s155
    %s158 = sphi 0, %s157
    %s172 = sphi 0, %s158
    %s176 = sphi 0, %s176
    %s178 = sphi 0, %s176
    %s179 = sphi 0, %s178
    %s193 = sphi 0, %s179
    %s197 = sphi 0, %s197
    %s199 = sphi 0, %s197
    %s200 = sphi 0, %s199
    %s214 = sphi 0, %s200
    %s218 = sphi 0, %s218
    %s220 = sphi 0, %s218
    %s221 = sphi 0, %s220
    %s235 = sphi 0, %s221
    %s241 = sphi 0, %s243
    %s244 = sphi 0, %s241
    %s245 = sphi 0, %s244
    %s261 = sphi 0, %s245
  $region4: #{_lambda_.1} parent=0 // loop_header_branch
    %19 = sbr.rel (%p17) target = $region8
  $region5: #{_lambda_.1} parent=0 // loop_body
    %s21 = ssub.s32 %s16, 1
    %s22 = ssub.s32 %s16, 2
    %s23 = sadd.s32 %s16, 1
    %s24 = ssub.s32 %s16, %s23
    %p25 = scmp.eq.s32.totalorder %s24, 0
    %s27 = sadd.s32 %s26, 1
    %s28 = scalar_select %p25, %s26, %s27
    %p31 = pneg %p25
    %p32 = scmp.eq.s32.totalorder %s16, 1
    %p33 = por %p31, %p32
    %p34 = scmp.ne.s32.totalorder %s26, %s29
    %p35 = scmp.eq.s32.totalorder %s16, 0
    %p36 = por %p34, %p35
    %p37 = scmp.ne.s32.totalorder %s26, %s29
    %p38 = scmp.eq.s32.totalorder %s21, 1
    %p39 = por %p37, %p38
    %p40 = scmp.ne.s32.totalorder %s29, %s30
    %p41 = scmp.eq.s32.totalorder %s21, 0
    %p42 = por %p40, %p41
    %p43 = scmp.ne.s32.totalorder %s29, %s30
    %p44 = scmp.eq.s32.totalorder %s22, 1
    %p45 = por %p43, %p44
    %p47 = scmp.ne.s32.totalorder %s30, %s46
    %p48 = scmp.eq.s32.totalorder %s22, 0
    %p49 = por %p47, %p48
    %s51 = sadd.s32 %s50, 1
    %p54 = scmp.eq.s32.totalorder %s16, 1
    %p55 = scmp.ne.s32.totalorder %s50, %s52
    %p56 = scmp.eq.s32.totalorder %s16, 0
    %p57 = por %p55, %p56
    %p58 = scmp.ne.s32.totalorder %s50, %s52
    %p59 = scmp.eq.s32.totalorder %s21, 1
    %p60 = por %p58, %p59
    %p61 = scmp.ne.s32.totalorder %s52, %s53
    %p62 = scmp.eq.s32.totalorder %s21, 0
    %p63 = por %p61, %p62
    %p64 = scmp.ne.s32.totalorder %s52, %s53
    %p65 = scmp.eq.s32.totalorder %s22, 1
    %p66 = por %p64, %p65
    %p68 = scmp.ne.s32.totalorder %s53, %s67
    %p69 = scmp.eq.s32.totalorder %s22, 0
    %p70 = por %p68, %p69
    %s72 = sadd.s32 %s71, 1
    %p75 = scmp.eq.s32.totalorder %s16, 1
    %p76 = scmp.ne.s32.totalorder %s71, %s73
    %p77 = scmp.eq.s32.totalorder %s16, 0
    %p78 = por %p76, %p77
    %p79 = scmp.ne.s32.totalorder %s71, %s73
    %p80 = scmp.eq.s32.totalorder %s21, 1
    %p81 = por %p79, %p80
    %p82 = scmp.ne.s32.totalorder %s73, %s74
    %p83 = scmp.eq.s32.totalorder %s21, 0
    %p84 = por %p82, %p83
    %p85 = scmp.ne.s32.totalorder %s73, %s74
    %p86 = scmp.eq.s32.totalorder %s22, 1
    %p87 = por %p85, %p86
    %p89 = scmp.ne.s32.totalorder %s74, %s88
    %p90 = scmp.eq.s32.totalorder %s22, 0
    %p91 = por %p89, %p90
    %s93 = sadd.s32 %s92, 1
    %p96 = scmp.eq.s32.totalorder %s16, 1
    %p97 = scmp.ne.s32.totalorder %s92, %s94
    %p98 = scmp.eq.s32.totalorder %s16, 0
    %p99 = por %p97, %p98
    %p100 = scmp.ne.s32.totalorder %s92, %s94
    %p101 = scmp.eq.s32.totalorder %s21, 1
    %p102 = por %p100, %p101
    %p103 = scmp.ne.s32.totalorder %s94, %s95
    %p104 = scmp.eq.s32.totalorder %s21, 0
    %p105 = por %p103, %p104
    %p106 = scmp.ne.s32.totalorder %s94, %s95
    %p107 = scmp.eq.s32.totalorder %s22, 1
    %p108 = por %p106, %p107
    %p110 = scmp.ne.s32.totalorder %s95, %s109
    %p111 = scmp.eq.s32.totalorder %s22, 0
    %p112 = por %p110, %p111
    %s114 = sadd.s32 %s113, 1
    %p117 = scmp.eq.s32.totalorder %s16, 1
    %p118 = scmp.ne.s32.totalorder %s113, %s115
    %p119 = scmp.eq.s32.totalorder %s16, 0
    %p120 = por %p118, %p119
    %p121 = scmp.ne.s32.totalorder %s113, %s115
    %p122 = scmp.eq.s32.totalorder %s21, 1
    %p123 = por %p121, %p122
    %p124 = scmp.ne.s32.totalorder %s115, %s116
    %p125 = scmp.eq.s32.totalorder %s21, 0
    %p126 = por %p124, %p125
    %p127 = scmp.ne.s32.totalorder %s115, %s116
    %p128 = scmp.eq.s32.totalorder %s22, 1
    %p129 = por %p127, %p128
    %p131 = scmp.ne.s32.totalorder %s116, %s130
    %p132 = scmp.eq.s32.totalorder %s22, 0
    %p133 = por %p131, %p132
    %s135 = sadd.s32 %s134, 1
    %p138 = scmp.eq.s32.totalorder %s16, 1
    %p139 = scmp.ne.s32.totalorder %s134, %s136
    %p140 = scmp.eq.s32.totalorder %s16, 0
    %p141 = por %p139, %p140
    %p142 = scmp.ne.s32.totalorder %s134, %s136
    %p143 = scmp.eq.s32.totalorder %s21, 1
    %p144 = por %p142, %p143
    %p145 = scmp.ne.s32.totalorder %s136, %s137
    %p146 = scmp.eq.s32.totalorder %s21, 0
    %p147 = por %p145, %p146
    %p148 = scmp.ne.s32.totalorder %s136, %s137
    %p149 = scmp.eq.s32.totalorder %s22, 1
    %p150 = por %p148, %p149
    %p152 = scmp.ne.s32.totalorder %s137, %s151
    %p153 = scmp.eq.s32.totalorder %s22, 0
    %p154 = por %p152, %p153
    %s156 = sadd.s32 %s155, 1
    %p159 = scmp.eq.s32.totalorder %s16, 1
    %p160 = scmp.ne.s32.totalorder %s155, %s157
    %p161 = scmp.eq.s32.totalorder %s16, 0
    %p162 = por %p160, %p161
    %p163 = scmp.ne.s32.totalorder %s155, %s157
    %p164 = scmp.eq.s32.totalorder %s21, 1
    %p165 = por %p163, %p164
    %p166 = scmp.ne.s32.totalorder %s157, %s158
    %p167 = scmp.eq.s32.totalorder %s21, 0
    %p168 = por %p166, %p167
    %p169 = scmp.ne.s32.totalorder %s157, %s158
    %p170 = scmp.eq.s32.totalorder %s22, 1
    %p171 = por %p169, %p170
    %p173 = scmp.ne.s32.totalorder %s158, %s172
    %p174 = scmp.eq.s32.totalorder %s22, 0
    %p175 = por %p173, %p174
    %s177 = sadd.s32 %s176, 1
    %p180 = scmp.eq.s32.totalorder %s16, 1
    %p181 = scmp.ne.s32.totalorder %s176, %s178
    %p182 = scmp.eq.s32.totalorder %s16, 0
    %p183 = por %p181, %p182
    %p184 = scmp.ne.s32.totalorder %s176, %s178
    %p185 = scmp.eq.s32.totalorder %s21, 1
    %p186 = por %p184, %p185
    %p187 = scmp.ne.s32.totalorder %s178, %s179
    %p188 = scmp.eq.s32.totalorder %s21, 0
    %p189 = por %p187, %p188
    %p190 = scmp.ne.s32.totalorder %s178, %s179
    %p191 = scmp.eq.s32.totalorder %s22, 1
    %p192 = por %p190, %p191
    %p194 = scmp.ne.s32.totalorder %s179, %s193
    %p195 = scmp.eq.s32.totalorder %s22, 0
    %p196 = por %p194, %p195
    %s198 = sadd.s32 %s197, 1
    %p201 = scmp.eq.s32.totalorder %s16, 1
    %p202 = scmp.ne.s32.totalorder %s197, %s199
    %p203 = scmp.eq.s32.totalorder %s16, 0
    %p204 = por %p202, %p203
    %p205 = scmp.ne.s32.totalorder %s197, %s199
    %p206 = scmp.eq.s32.totalorder %s21, 1
    %p207 = por %p205, %p206
    %p208 = scmp.ne.s32.totalorder %s199, %s200
    %p209 = scmp.eq.s32.totalorder %s21, 0
    %p210 = por %p208, %p209
    %p211 = scmp.ne.s32.totalorder %s199, %s200
    %p212 = scmp.eq.s32.totalorder %s22, 1
    %p213 = por %p211, %p212
    %p215 = scmp.ne.s32.totalorder %s200, %s214
    %p216 = scmp.eq.s32.totalorder %s22, 0
    %p217 = por %p215, %p216
    %s219 = sadd.s32 %s218, 1
    %p222 = scmp.eq.s32.totalorder %s16, 1
    %p223 = scmp.ne.s32.totalorder %s218, %s220
    %p224 = scmp.eq.s32.totalorder %s16, 0
    %p225 = por %p223, %p224
    %p226 = scmp.ne.s32.totalorder %s218, %s220
    %p227 = scmp.eq.s32.totalorder %s21, 1
    %p228 = por %p226, %p227
    %p229 = scmp.ne.s32.totalorder %s220, %s221
    %p230 = scmp.eq.s32.totalorder %s21, 0
    %p231 = por %p229, %p230
    %p232 = scmp.ne.s32.totalorder %s220, %s221
    %p233 = scmp.eq.s32.totalorder %s22, 1
    %p234 = por %p232, %p233
    %p236 = scmp.ne.s32.totalorder %s221, %s235
    %p237 = scmp.eq.s32.totalorder %s22, 0
    %p238 = por %p236, %p237
    %s239 = ssub.s32 %s16, %s23
    %p240 = scmp.eq.s32.totalorder %s239, 0
    %s242 = sadd.s32 %s241, 1
    %s243 = scalar_select %p240, %s241, %s242
    %p246 = pneg %p240
    %p247 = scmp.eq.s32.totalorder %s16, 1
    %p248 = por %p246, %p247
    %p249 = scmp.ne.s32.totalorder %s241, %s244
    %p250 = scmp.eq.s32.totalorder %s16, 0
    %p251 = por %p249, %p250
    %p252 = scmp.ne.s32.totalorder %s241, %s244
    %p253 = scmp.eq.s32.totalorder %s21, 1
    %p254 = por %p252, %p253
    %p255 = scmp.ne.s32.totalorder %s244, %s245
    %p256 = scmp.eq.s32.totalorder %s21, 0
    %p257 = por %p255, %p256
    %p258 = scmp.ne.s32.totalorder %s244, %s245
    %p259 = scmp.eq.s32.totalorder %s22, 1
    %p260 = por %p258, %p259
    %p262 = scmp.ne.s32.totalorder %s245, %s261
    %p263 = scmp.eq.s32.totalorder %s22, 0
    %p264 = por %p262, %p263
    %p265 = scmp.le.s32.totalorder 1, %s16
    %p266 = scmp.lt.s32.totalorder %s16, 3
    %p267 = pnand %p265, %p266
    %p268 = pneg %p267
    // Predicated region
    $region9: #{_lambda_.1} parent=5 // pred_check
      _
    $region10: #{_lambda_.1} parent=5 // pred_check_branch
      %270 = sbr.rel (%p267) target = $region12
    $region11: #{_lambda_.1} parent=5 // pred_region
      %s271 = ssub.s32 %s16, 1
      // Predicated region
      $region13: #{_lambda_.1} parent=11 // pred_check
        %p272 = pneg %p63
      $region14: #{_lambda_.1} parent=11 // pred_check_branch
        %274 = sbr.rel (%p272) target = $region16
      $region15: #{_lambda_.1} parent=11 // pred_region
        _
      $region16: #{_lambda_.1} parent=11 // pred_fallthru
        _
      // Predicated region
      $region17: #{_lambda_.1} parent=11 // pred_check
        %p275 = pneg %p84
      $region18: #{_lambda_.1} parent=11 // pred_check_branch
        %277 = sbr.rel (%p275) target = $region20
      $region19: #{_lambda_.1} parent=11 // pred_region
        _
      $region20: #{_lambda_.1} parent=11 // pred_fallthru
        _
      // Predicated region
      $region21: #{_lambda_.1} parent=11 // pred_check
        %p278 = pneg %p105
      $region22: #{_lambda_.1} parent=11 // pred_check_branch
        %280 = sbr.rel (%p278) target = $region24
      $region23: #{_lambda_.1} parent=11 // pred_region
        _
      $region24: #{_lambda_.1} parent=11 // pred_fallthru
        _
      // Predicated region
      $region25: #{_lambda_.1} parent=11 // pred_check
        %p281 = pneg %p126
      $region26: #{_lambda_.1} parent=11 // pred_check_branch
        %283 = sbr.rel (%p281) target = $region28
      $region27: #{_lambda_.1} parent=11 // pred_region
        _
      $region28: #{_lambda_.1} parent=11 // pred_fallthru
        _
      // Predicated region
      $region29: #{_lambda_.1} parent=11 // pred_check
        %p284 = pneg %p147
      $region30: #{_lambda_.1} parent=11 // pred_check_branch
        %286 = sbr.rel (%p284) target = $region32
      $region31: #{_lambda_.1} parent=11 // pred_region
        _
      $region32: #{_lambda_.1} parent=11 // pred_fallthru
        _
      // Predicated region
      $region33: #{_lambda_.1} parent=11 // pred_check
        %p287 = pneg %p168
      $region34: #{_lambda_.1} parent=11 // pred_check_branch
        %289 = sbr.rel (%p287) target = $region36
      $region35: #{_lambda_.1} parent=11 // pred_region
        _
      $region36: #{_lambda_.1} parent=11 // pred_fallthru
        _
      // Predicated region
      $region37: #{_lambda_.1} parent=11 // pred_check
        %p290 = pneg %p189
      $region38: #{_lambda_.1} parent=11 // pred_check_branch
        %292 = sbr.rel (%p290) target = $region40
      $region39: #{_lambda_.1} parent=11 // pred_region
        _
      $region40: #{_lambda_.1} parent=11 // pred_fallthru
        _
      // Predicated region
      $region41: #{_lambda_.1} parent=11 // pred_check
        %p293 = pneg %p210
      $region42: #{_lambda_.1} parent=11 // pred_check_branch
        %295 = sbr.rel (%p293) target = $region44
      $region43: #{_lambda_.1} parent=11 // pred_region
        _
      $region44: #{_lambda_.1} parent=11 // pred_fallthru
        _
      // Predicated region
      $region45: #{_lambda_.1} parent=11 // pred_check
        %p296 = pneg %p231
      $region46: #{_lambda_.1} parent=11 // pred_check_branch
        %298 = sbr.rel (%p296) target = $region48
      $region47: #{_lambda_.1} parent=11 // pred_region
        _
      $region48: #{_lambda_.1} parent=11 // pred_fallthru
        _
    $region12: #{_lambda_.1} parent=5 // pred_fallthru
      _
    %p299 = scmp.lt.s32.totalorder %s16, 2
    // Predicated region
    $region49: #{_lambda_.1} parent=5 // pred_check
      %p300 = pneg %p299
    $region50: #{_lambda_.1} parent=5 // pred_check_branch
      %302 = sbr.rel (%p300) target = $region52
    $region51: #{_lambda_.1} parent=5 // pred_region
      // Predicated region
      $region53: #{_lambda_.1} parent=51 // pred_check
        %p303 = pneg %p36
      $region54: #{_lambda_.1} parent=51 // pred_check_branch
        %305 = sbr.rel (%p303) target = $region56
      $region55: #{_lambda_.1} parent=51 // pred_region
        %p306 = scmp.lt.s32.totalorder %s16, 1
        %s307 = scalar_select %p306, %s16, 1
        %s308 = smul.addr %s307, 6
        %s309 = smul.addr %s308, 4
        %s310 = scalar_lea.vmem %s0, %s309
      $region56: #{_lambda_.1} parent=51 // pred_fallthru
        _
    $region52: #{_lambda_.1} parent=5 // pred_fallthru
      _
    %p311 = scmp.le.s32.totalorder 1, %s16
    %p312 = scmp.lt.s32.totalorder %s16, 3
    %p313 = pnand %p311, %p312
    %p314 = pneg %p313
    // Predicated region
    $region57: #{_lambda_.1} parent=5 // pred_check
      _
    $region58: #{_lambda_.1} parent=5 // pred_check_branch
      %316 = sbr.rel (%p313) target = $region60
    $region59: #{_lambda_.1} parent=5 // pred_region
      %s317 = ssub.s32 %s16, 1
      %p318 = scmp.lt.s32.totalorder %s21, 1
      %s319 = scalar_select %p318, %s21, 1
      %s320 = smul.addr %s319, 6
      %s321 = smul.addr %s320, 4
      %s322 = scalar_lea.vmem %s0, %s321
      %p323 = pneg %p42
      %p324 = pneg %p39
      %p325 = pneg %p63
      %p326 = pneg %p60
      %p327 = pneg %p84
      %p328 = pneg %p81
      %p329 = pneg %p105
      %p330 = pneg %p102
      %p331 = pneg %p126
      %p332 = pneg %p123
      %p333 = pneg %p147
      %p334 = pneg %p144
      %p335 = pneg %p168
      %p336 = pneg %p165
      %p337 = pneg %p189
      %p338 = pneg %p186
      %p339 = pneg %p210
      %p340 = pneg %p207
      %p341 = pneg %p231
      %p342 = pneg %p228
      %p343 = pneg %p257
      %p344 = pneg %p254
      %p345 = scmp.lt.s32.totalorder %s21, 1
      %s346 = scalar_select %p345, %s21, 1
      %s347 = smul.addr %s346, 2
      %s348 = smul.addr %s347, 4
      %s349 = scalar_lea.vmem %s10, %s348
      %p350 = scmp.lt.s32.totalorder %s21, 1
      %s351 = scalar_select %p350, %s21, 1
      %s352 = smul.addr %s351, 6
      %s353 = smul.addr %s352, 4
      %s354 = scalar_lea.vmem %s0, %s353
      %p355 = scmp.lt.s32.totalorder %s21, 1
      %s356 = scalar_select %p355, %s21, 1
      %s357 = smul.addr %s356, 2
      %s358 = smul.addr %s357, 4
      %s359 = scalar_lea.vmem %s10, %s358
      %v360 = vld [vmem:[%s354] sm:$0xff]
      %v361 = vld [vmem:[%s354 + $0x8] sm:$0xff]
      %v362 = vld [vmem:[%s354 + $0x10] sm:$0x11]
      %v363 = vld [vmem:[%s1] sm:$0xff]
      %v364 = vld [vmem:[%s1 + $0x8] sm:$0xff]
      %v365 = vld [vmem:[%s1 + $0x10] sm:$0xff]
      %v366 = vld [vmem:[%s1 + $0x18] sm:$0xff]
      %v367 = vld [vmem:[%s1 + $0x20] sm:$0xff]
      %v368 = vld [vmem:[%s1 + $0x28] sm:$0xff]
      %v369 = vld [vmem:[%s1 + $0x30] sm:$0xff]
      %v370 = vld [vmem:[%s1 + $0x38] sm:$0xff]
      %v371 = vld [vmem:[%s1 + $0x40] sm:$0xff]
      %v372 = vld [vmem:[%s1 + $0x48] sm:$0xff]
      %v373 = vld [vmem:[%s1 + $0x50] sm:$0xff]
      %v374 = vld [vmem:[%s1 + $0x58] sm:$0xff]
      %v375 = vld [vmem:[%s1 + $0x60] sm:$0xff]
      %v376 = vld [vmem:[%s1 + $0x68] sm:$0xff]
      %v377 = vld [vmem:[%s1 + $0x70] sm:$0xff]
      %v378 = vld [vmem:[%s1 + $0x78] sm:$0xff]
      %v379 = vld [vmem:[%s1 + $0x80] sm:$0xff]
      %v380 = vld [vmem:[%s1 + $0x88] sm:$0xff]
      %v381 = vld [vmem:[%s1 + $0x90] sm:$0xff]
      %v382 = vld [vmem:[%s1 + $0x98] sm:$0xff]
      %v383 = vld [vmem:[%s1 + $0xa0] sm:$0xff]
      %v384 = vld [vmem:[%s1 + $0xa8] sm:$0xff]
      %v385 = vld [vmem:[%s1 + $0xb0] sm:$0xff]
      %v386 = vld [vmem:[%s1 + $0xb8] sm:$0xff]
      %v387 = vld [vmem:[%s1 + $0xc0] sm:$0xff]
      %v388 = vld [vmem:[%s1 + $0xc8] sm:$0xff]
      %v389 = vld [vmem:[%s1 + $0xd0] sm:$0xff]
      %v390 = vld [vmem:[%s1 + $0xd8] sm:$0xff]
      %v391 = vld [vmem:[%s1 + $0xe0] sm:$0xff]
      %v392 = vld [vmem:[%s1 + $0xe8] sm:$0xff]
      %v393 = vld [vmem:[%s1 + $0xf0] sm:$0xff]
      %v394 = vld [vmem:[%s1 + $0xf8] sm:$0xff]
      %s395 = scalar_lea.vmem %s1, 256
      %v396 = vld [vmem:[%s395] sm:$0xff]
      %v397 = vld [vmem:[%s395 + $0x8] sm:$0xff]
      %v398 = vld [vmem:[%s395 + $0x10] sm:$0xff]
      %v399 = vld [vmem:[%s395 + $0x18] sm:$0xff]
      %v400 = vld [vmem:[%s395 + $0x20] sm:$0xff]
      %v401 = vld [vmem:[%s395 + $0x28] sm:$0xff]
      %v402 = vld [vmem:[%s395 + $0x30] sm:$0xff]
      %v403 = vld [vmem:[%s395 + $0x38] sm:$0xff]
      %v404 = vld [vmem:[%s395 + $0x40] sm:$0xff]
      %v405 = vld [vmem:[%s395 + $0x48] sm:$0xff]
      %v406 = vld [vmem:[%s395 + $0x50] sm:$0xff]
      %v407 = vld [vmem:[%s395 + $0x58] sm:$0xff]
      %v408 = vld [vmem:[%s395 + $0x60] sm:$0xff]
      %v409 = vld [vmem:[%s395 + $0x68] sm:$0xff]
      %v410 = vld [vmem:[%s395 + $0x70] sm:$0xff]
      %v411 = vld [vmem:[%s395 + $0x78] sm:$0xff]
      %v412 = vld [vmem:[%s395 + $0x80] sm:$0xff]
      %v413 = vld [vmem:[%s395 + $0x88] sm:$0xff]
      %v414 = vld [vmem:[%s395 + $0x90] sm:$0xff]
      %v415 = vld [vmem:[%s395 + $0x98] sm:$0xff]
      %v416 = vld [vmem:[%s395 + $0xa0] sm:$0xff]
      %v417 = vld [vmem:[%s395 + $0xa8] sm:$0xff]
      %v418 = vld [vmem:[%s395 + $0xb0] sm:$0xff]
      %v419 = vld [vmem:[%s395 + $0xb8] sm:$0xff]
      %v420 = vld [vmem:[%s395 + $0xc0] sm:$0xff]
      %v421 = vld [vmem:[%s395 + $0xc8] sm:$0xff]
      %v422 = vld [vmem:[%s395 + $0xd0] sm:$0xff]
      %v423 = vld [vmem:[%s395 + $0xd8] sm:$0xff]
      %v424 = vld [vmem:[%s395 + $0xe0] sm:$0xff]
      %v425 = vld [vmem:[%s395 + $0xe8] sm:$0xff]
      %v426 = vld [vmem:[%s395 + $0xf0] sm:$0xff]
      %v427 = vld [vmem:[%s395 + $0xf8] sm:$0xff]
      %v430 = vunpack.c.l.b16 %v361
      %v431 = vunpack.c.h.b16 %v361
      %v432 = vunpack.c.l.b16 %v362
      %v433 = vunpack.c.h.b16 %v362
      %v434 = vpack.c.b16 %v432, %v430
      %v435 = vpack.c.b16 %v433, %v431
      %v437 = vshrl.u32 %v434, 16
      %v439 = vshll.u32 %v434, 16
      %v441 = vrot.slane %v439, 1
      %v442 = vor.u32 %v437, %v441
      %v444 = vshrl.u32 %v435, 16
      %v446 = vshll.u32 %v435, 16
      %v448 = vrot.slane %v446, 1
      %v449 = vor.u32 %v444, %v448
      %v484 = vunpack.c.l.b16 %v396
      %v485 = vunpack.c.h.b16 %v396
      %v486 = vunpack.c.l.b16 %v397
      %v487 = vunpack.c.h.b16 %v397
      %v488 = vunpack.c.l.b16 %v398
      %v489 = vunpack.c.h.b16 %v398
      %v490 = vunpack.c.l.b16 %v399
      %v491 = vunpack.c.h.b16 %v399
      %v492 = vunpack.c.l.b16 %v400
      %v493 = vunpack.c.h.b16 %v400
      %v494 = vunpack.c.l.b16 %v401
      %v495 = vunpack.c.h.b16 %v401
      %v496 = vunpack.c.l.b16 %v402
      %v497 = vunpack.c.h.b16 %v402
      %v498 = vunpack.c.l.b16 %v403
      %v499 = vunpack.c.h.b16 %v403
      %v500 = vunpack.c.l.b16 %v404
      %v501 = vunpack.c.h.b16 %v404
      %v502 = vunpack.c.l.b16 %v405
      %v503 = vunpack.c.h.b16 %v405
      %v504 = vunpack.c.l.b16 %v406
      %v505 = vunpack.c.h.b16 %v406
      %v506 = vunpack.c.l.b16 %v407
      %v507 = vunpack.c.h.b16 %v407
      %v508 = vunpack.c.l.b16 %v408
      %v509 = vunpack.c.h.b16 %v408
      %v510 = vunpack.c.l.b16 %v409
      %v511 = vunpack.c.h.b16 %v409
      %v512 = vunpack.c.l.b16 %v410
      %v513 = vunpack.c.h.b16 %v410
      %v514 = vunpack.c.l.b16 %v411
      %v515 = vunpack.c.h.b16 %v411
      %v516 = vunpack.c.l.b16 %v412
      %v517 = vunpack.c.h.b16 %v412
      %v518 = vunpack.c.l.b16 %v413
      %v519 = vunpack.c.h.b16 %v413
      %v520 = vunpack.c.l.b16 %v414
      %v521 = vunpack.c.h.b16 %v414
      %v522 = vunpack.c.l.b16 %v415
      %v523 = vunpack.c.h.b16 %v415
      %v524 = vunpack.c.l.b16 %v416
      %v525 = vunpack.c.h.b16 %v416
      %v526 = vunpack.c.l.b16 %v417
      %v527 = vunpack.c.h.b16 %v417
      %v528 = vunpack.c.l.b16 %v418
      %v529 = vunpack.c.h.b16 %v418
      %v530 = vunpack.c.l.b16 %v419
      %v531 = vunpack.c.h.b16 %v419
      %v532 = vunpack.c.l.b16 %v420
      %v533 = vunpack.c.h.b16 %v420
      %v534 = vunpack.c.l.b16 %v421
      %v535 = vunpack.c.h.b16 %v421
      %v536 = vunpack.c.l.b16 %v422
      %v537 = vunpack.c.h.b16 %v422
      %v538 = vunpack.c.l.b16 %v423
      %v539 = vunpack.c.h.b16 %v423
      %v540 = vunpack.c.l.b16 %v424
      %v541 = vunpack.c.h.b16 %v424
      %v542 = vunpack.c.l.b16 %v425
      %v543 = vunpack.c.h.b16 %v425
      %v544 = vunpack.c.l.b16 %v426
      %v545 = vunpack.c.h.b16 %v426
      %v546 = vunpack.c.l.b16 %v427
      %v547 = vunpack.c.h.b16 %v427
      %v548 = vpack.c.b16 %v486, %v484
      %v549 = vpack.c.b16 %v487, %v485
      %v550 = vpack.c.b16 %v490, %v488
      %v551 = vpack.c.b16 %v491, %v489
      %v552 = vpack.c.b16 %v494, %v492
      %v553 = vpack.c.b16 %v495, %v493
      %v554 = vpack.c.b16 %v498, %v496
      %v555 = vpack.c.b16 %v499, %v497
      %v556 = vpack.c.b16 %v502, %v500
      %v557 = vpack.c.b16 %v503, %v501
      %v558 = vpack.c.b16 %v506, %v504
      %v559 = vpack.c.b16 %v507, %v505
      %v560 = vpack.c.b16 %v510, %v508
      %v561 = vpack.c.b16 %v511, %v509
      %v562 = vpack.c.b16 %v514, %v512
      %v563 = vpack.c.b16 %v515, %v513
      %v564 = vpack.c.b16 %v518, %v516
      %v565 = vpack.c.b16 %v519, %v517
      %v566 = vpack.c.b16 %v522, %v520
      %v567 = vpack.c.b16 %v523, %v521
      %v568 = vpack.c.b16 %v526, %v524
      %v569 = vpack.c.b16 %v527, %v525
      %v570 = vpack.c.b16 %v530, %v528
      %v571 = vpack.c.b16 %v531, %v529
      %v572 = vpack.c.b16 %v534, %v532
      %v573 = vpack.c.b16 %v535, %v533
      %v574 = vpack.c.b16 %v538, %v536
      %v575 = vpack.c.b16 %v539, %v537
      %v576 = vpack.c.b16 %v542, %v540
      %v577 = vpack.c.b16 %v543, %v541
      %v578 = vpack.c.b16 %v546, %v544
      %v579 = vpack.c.b16 %v547, %v545
      %612 = vmatprep.subr.bf16.mxu0 %v563
      %613 = vmatpush1.bf16.msra.mxu0 %v562
      %614 = vmatprep.subr.bf16.mxu0 %v561
      %615 = vmatpush1.bf16.msra.mxu0 %v560
      %616 = vmatprep.subr.bf16.mxu0 %v559
      %617 = vmatpush1.bf16.msra.mxu0 %v558
      %618 = vmatprep.subr.bf16.mxu0 %v557
      %619 = vmatpush1.bf16.msra.mxu0 %v556
      %620 = vmatprep.subr.bf16.mxu0 %v555
      %621 = vmatpush1.bf16.msra.mxu0 %v554
      %622 = vmatprep.subr.bf16.mxu0 %v553
      %623 = vmatpush1.bf16.msra.mxu0 %v552
      %624 = vmatprep.subr.bf16.mxu0 %v551
      %625 = vmatpush1.bf16.msra.mxu0 %v550
      %626 = vmatprep.subr.bf16.mxu0 %v549
      %627 = vmatpush1.bf16.msra.mxu0 %v548
      %628 = vmatprep.subr.bf16.mxu0 %v579
      %629 = vmatpush2.bf16.msra.mxu0 %v578
      %630 = vmatprep.subr.bf16.mxu0 %v577
      %631 = vmatpush2.bf16.msra.mxu0 %v576
      %632 = vmatprep.subr.bf16.mxu0 %v575
      %633 = vmatpush2.bf16.msra.mxu0 %v574
      %634 = vmatprep.subr.bf16.mxu0 %v573
      %635 = vmatpush2.bf16.msra.mxu0 %v572
      %636 = vmatprep.subr.bf16.mxu0 %v571
      %637 = vmatpush2.bf16.msra.mxu0 %v570
      %638 = vmatprep.subr.bf16.mxu0 %v569
      %639 = vmatpush2.bf16.msra.mxu0 %v568
      %640 = vmatprep.subr.bf16.mxu0 %v567
      %641 = vmatpush2.bf16.msra.mxu0 %v566
      %642 = vmatprep.subr.bf16.mxu0 %v565
      %643 = vmatpush2.bf16.msra.mxu0 %v564
      %644 = vmatprep.mubr.bf16.mxu0 %v449
      %645 = vmatmul.mubr.bf16.gmra.mxu0 %v442
      %v646 = vpop.f32.mrf.mxu0
      %v647 = vadd.f32 0.0, %v646
      %v648 = vpop.f32.mrf.mxu0
      %v649 = vadd.f32 0.0, %v648
      %v650 = vpop.f32.mrf.mxu0
      %v651 = vpop.f32.mrf.mxu0
      %652 = vdwg.mxu0
      %v654 = vunpack.c.l.b16 %v360
      %v655 = vunpack.c.h.b16 %v360
      %v656 = vpack.c.b16 %v654, %v654
      %v657 = vpack.c.b16 %v655, %v655
      %v692 = vunpack.c.l.b16 %v363
      %v693 = vunpack.c.h.b16 %v363
      %v694 = vunpack.c.l.b16 %v364
      %v695 = vunpack.c.h.b16 %v364
      %v696 = vunpack.c.l.b16 %v365
      %v697 = vunpack.c.h.b16 %v365
      %v698 = vunpack.c.l.b16 %v366
      %v699 = vunpack.c.h.b16 %v366
      %v700 = vunpack.c.l.b16 %v367
      %v701 = vunpack.c.h.b16 %v367
      %v702 = vunpack.c.l.b16 %v368
      %v703 = vunpack.c.h.b16 %v368
      %v704 = vunpack.c.l.b16 %v369
      %v705 = vunpack.c.h.b16 %v369
      %v706 = vunpack.c.l.b16 %v370
      %v707 = vunpack.c.h.b16 %v370
      %v708 = vunpack.c.l.b16 %v371
      %v709 = vunpack.c.h.b16 %v371
      %v710 = vunpack.c.l.b16 %v372
      %v711 = vunpack.c.h.b16 %v372
      %v712 = vunpack.c.l.b16 %v373
      %v713 = vunpack.c.h.b16 %v373
      %v714 = vunpack.c.l.b16 %v374
      %v715 = vunpack.c.h.b16 %v374
      %v716 = vunpack.c.l.b16 %v375
      %v717 = vunpack.c.h.b16 %v375
      %v718 = vunpack.c.l.b16 %v376
      %v719 = vunpack.c.h.b16 %v376
      %v720 = vunpack.c.l.b16 %v377
      %v721 = vunpack.c.h.b16 %v377
      %v722 = vunpack.c.l.b16 %v378
      %v723 = vunpack.c.h.b16 %v378
      %v724 = vunpack.c.l.b16 %v379
      %v725 = vunpack.c.h.b16 %v379
      %v726 = vunpack.c.l.b16 %v380
      %v727 = vunpack.c.h.b16 %v380
      %v728 = vunpack.c.l.b16 %v381
      %v729 = vunpack.c.h.b16 %v381
      %v730 = vunpack.c.l.b16 %v382
      %v731 = vunpack.c.h.b16 %v382
      %v732 = vunpack.c.l.b16 %v383
      %v733 = vunpack.c.h.b16 %v383
      %v734 = vunpack.c.l.b16 %v384
      %v735 = vunpack.c.h.b16 %v384
      %v736 = vunpack.c.l.b16 %v385
      %v737 = vunpack.c.h.b16 %v385
      %v738 = vunpack.c.l.b16 %v386
      %v739 = vunpack.c.h.b16 %v386
      %v740 = vunpack.c.l.b16 %v387
      %v741 = vunpack.c.h.b16 %v387
      %v742 = vunpack.c.l.b16 %v388
      %v743 = vunpack.c.h.b16 %v388
      %v744 = vunpack.c.l.b16 %v389
      %v745 = vunpack.c.h.b16 %v389
      %v746 = vunpack.c.l.b16 %v390
      %v747 = vunpack.c.h.b16 %v390
      %v748 = vunpack.c.l.b16 %v391
      %v749 = vunpack.c.h.b16 %v391
      %v750 = vunpack.c.l.b16 %v392
      %v751 = vunpack.c.h.b16 %v392
      %v752 = vunpack.c.l.b16 %v393
      %v753 = vunpack.c.h.b16 %v393
      %v754 = vunpack.c.l.b16 %v394
      %v755 = vunpack.c.h.b16 %v394
      %v756 = vpack.c.b16 %v694, %v692
      %v757 = vpack.c.b16 %v695, %v693
      %v758 = vpack.c.b16 %v698, %v696
      %v759 = vpack.c.b16 %v699, %v697
      %v760 = vpack.c.b16 %v702, %v700
      %v761 = vpack.c.b16 %v703, %v701
      %v762 = vpack.c.b16 %v706, %v704
      %v763 = vpack.c.b16 %v707, %v705
      %v764 = vpack.c.b16 %v710, %v708
      %v765 = vpack.c.b16 %v711, %v709
      %v766 = vpack.c.b16 %v714, %v712
      %v767 = vpack.c.b16 %v715, %v713
      %v768 = vpack.c.b16 %v718, %v716
      %v769 = vpack.c.b16 %v719, %v717
      %v770 = vpack.c.b16 %v722, %v720
      %v771 = vpack.c.b16 %v723, %v721
      %v772 = vpack.c.b16 %v726, %v724
      %v773 = vpack.c.b16 %v727, %v725
      %v774 = vpack.c.b16 %v730, %v728
      %v775 = vpack.c.b16 %v731, %v729
      %v776 = vpack.c.b16 %v734, %v732
      %v777 = vpack.c.b16 %v735, %v733
      %v778 = vpack.c.b16 %v738, %v736
      %v779 = vpack.c.b16 %v739, %v737
      %v780 = vpack.c.b16 %v742, %v740
      %v781 = vpack.c.b16 %v743, %v741
      %v782 = vpack.c.b16 %v746, %v744
      %v783 = vpack.c.b16 %v747, %v745
      %v784 = vpack.c.b16 %v750, %v748
      %v785 = vpack.c.b16 %v751, %v749
      %v786 = vpack.c.b16 %v754, %v752
      %v787 = vpack.c.b16 %v755, %v753
      %820 = vmatprep.subr.bf16.mxu0 %v771
      %821 = vmatpush1.bf16.msra.mxu0 %v770
      %822 = vmatprep.subr.bf16.mxu0 %v769
      %823 = vmatpush1.bf16.msra.mxu0 %v768
      %824 = vmatprep.subr.bf16.mxu0 %v767
      %825 = vmatpush1.bf16.msra.mxu0 %v766
      %826 = vmatprep.subr.bf16.mxu0 %v765
      %827 = vmatpush1.bf16.msra.mxu0 %v764
      %828 = vmatprep.subr.bf16.mxu0 %v763
      %829 = vmatpush1.bf16.msra.mxu0 %v762
      %830 = vmatprep.subr.bf16.mxu0 %v761
      %831 = vmatpush1.bf16.msra.mxu0 %v760
      %832 = vmatprep.subr.bf16.mxu0 %v759
      %833 = vmatpush1.bf16.msra.mxu0 %v758
      %834 = vmatprep.subr.bf16.mxu0 %v757
      %835 = vmatpush1.bf16.msra.mxu0 %v756
      %836 = vmatprep.subr.bf16.mxu0 %v787
      %837 = vmatpush2.bf16.msra.mxu0 %v786
      %838 = vmatprep.subr.bf16.mxu0 %v785
      %839 = vmatpush2.bf16.msra.mxu0 %v784
      %840 = vmatprep.subr.bf16.mxu0 %v783
      %841 = vmatpush2.bf16.msra.mxu0 %v782
      %842 = vmatprep.subr.bf16.mxu0 %v781
      %843 = vmatpush2.bf16.msra.mxu0 %v780
      %844 = vmatprep.subr.bf16.mxu0 %v779
      %845 = vmatpush2.bf16.msra.mxu0 %v778
      %846 = vmatprep.subr.bf16.mxu0 %v777
      %847 = vmatpush2.bf16.msra.mxu0 %v776
      %848 = vmatprep.subr.bf16.mxu0 %v775
      %849 = vmatpush2.bf16.msra.mxu0 %v774
      %850 = vmatprep.subr.bf16.mxu0 %v773
      %851 = vmatpush2.bf16.msra.mxu0 %v772
      %852 = vmatprep.mubr.bf16.mxu0 %v657
      %853 = vmatmul.mubr.bf16.gmra.mxu0 %v656
      %v854 = vpop.f32.mrf.mxu0
      %v855 = vadd.f32 %v647, %v854
      %v856 = vpop.f32.mrf.mxu0
      %v857 = vadd.f32 %v649, %v856
      %v858 = vpop.f32.mrf.mxu0
      %v859 = vpop.f32.mrf.mxu0
      %860 = vdwg.mxu0
      %s861 = scalar_lea.vmem %s1, 512
      %v862 = vld [vmem:[%s861] sm:$0xff]
      %v863 = vld [vmem:[%s861 + $0x8] sm:$0xff]
      %v864 = vld [vmem:[%s861 + $0x10] sm:$0xff]
      %v865 = vld [vmem:[%s861 + $0x18] sm:$0xff]
      %v866 = vld [vmem:[%s861 + $0x20] sm:$0xff]
      %v867 = vld [vmem:[%s861 + $0x28] sm:$0xff]
      %v868 = vld [vmem:[%s861 + $0x30] sm:$0xff]
      %v869 = vld [vmem:[%s861 + $0x38] sm:$0xff]
      %v870 = vld [vmem:[%s861 + $0x40] sm:$0xff]
      %v871 = vld [vmem:[%s861 + $0x48] sm:$0xff]
      %v872 = vld [vmem:[%s861 + $0x50] sm:$0xff]
      %v873 = vld [vmem:[%s861 + $0x58] sm:$0xff]
      %v874 = vld [vmem:[%s861 + $0x60] sm:$0xff]
      %v875 = vld [vmem:[%s861 + $0x68] sm:$0xff]
      %v876 = vld [vmem:[%s861 + $0x70] sm:$0xff]
      %v877 = vld [vmem:[%s861 + $0x78] sm:$0xff]
      %v878 = vld [vmem:[%s861 + $0x80] sm:$0xff]
      %v879 = vld [vmem:[%s861 + $0x88] sm:$0xff]
      %v880 = vld [vmem:[%s861 + $0x90] sm:$0xff]
      %v881 = vld [vmem:[%s861 + $0x98] sm:$0xff]
      %v882 = vld [vmem:[%s861 + $0xa0] sm:$0xff]
      %v883 = vld [vmem:[%s861 + $0xa8] sm:$0xff]
      %v884 = vld [vmem:[%s861 + $0xb0] sm:$0xff]
      %v885 = vld [vmem:[%s861 + $0xb8] sm:$0xff]
      %v886 = vld [vmem:[%s861 + $0xc0] sm:$0xff]
      %v887 = vld [vmem:[%s861 + $0xc8] sm:$0xff]
      %v888 = vld [vmem:[%s861 + $0xd0] sm:$0xff]
      %v889 = vld [vmem:[%s861 + $0xd8] sm:$0xff]
      %v890 = vld [vmem:[%s861 + $0xe0] sm:$0xff]
      %v891 = vld [vmem:[%s861 + $0xe8] sm:$0xff]
      %v892 = vld [vmem:[%s861 + $0xf0] sm:$0xff]
      %v893 = vld [vmem:[%s861 + $0xf8] sm:$0xff]
      %v894 = vpack.c.b16 %v430, %v654
      %v895 = vpack.c.b16 %v431, %v655
      %v897 = vshrl.u32 %v894, 16
      %v899 = vshll.u32 %v894, 16
      %v901 = vrot.slane %v899, 1
      %v902 = vor.u32 %v897, %v901
      %v904 = vshrl.u32 %v895, 16
      %v906 = vshll.u32 %v895, 16
      %v908 = vrot.slane %v906, 1
      %v909 = vor.u32 %v904, %v908
      %v944 = vunpack.c.l.b16 %v862
      %v945 = vunpack.c.h.b16 %v862
      %v946 = vunpack.c.l.b16 %v863
      %v947 = vunpack.c.h.b16 %v863
      %v948 = vunpack.c.l.b16 %v864
      %v949 = vunpack.c.h.b16 %v864
      %v950 = vunpack.c.l.b16 %v865
      %v951 = vunpack.c.h.b16 %v865
      %v952 = vunpack.c.l.b16 %v866
      %v953 = vunpack.c.h.b16 %v866
      %v954 = vunpack.c.l.b16 %v867
      %v955 = vunpack.c.h.b16 %v867
      %v956 = vunpack.c.l.b16 %v868
      %v957 = vunpack.c.h.b16 %v868
      %v958 = vunpack.c.l.b16 %v869
      %v959 = vunpack.c.h.b16 %v869
      %v960 = vunpack.c.l.b16 %v870
      %v961 = vunpack.c.h.b16 %v870
      %v962 = vunpack.c.l.b16 %v871
      %v963 = vunpack.c.h.b16 %v871
      %v964 = vunpack.c.l.b16 %v872
      %v965 = vunpack.c.h.b16 %v872
      %v966 = vunpack.c.l.b16 %v873
      %v967 = vunpack.c.h.b16 %v873
      %v968 = vunpack.c.l.b16 %v874
      %v969 = vunpack.c.h.b16 %v874
      %v970 = vunpack.c.l.b16 %v875
      %v971 = vunpack.c.h.b16 %v875
      %v972 = vunpack.c.l.b16 %v876
      %v973 = vunpack.c.h.b16 %v876
      %v974 = vunpack.c.l.b16 %v877
      %v975 = vunpack.c.h.b16 %v877
      %v976 = vunpack.c.l.b16 %v878
      %v977 = vunpack.c.h.b16 %v878
      %v978 = vunpack.c.l.b16 %v879
      %v979 = vunpack.c.h.b16 %v879
      %v980 = vunpack.c.l.b16 %v880
      %v981 = vunpack.c.h.b16 %v880
      %v982 = vunpack.c.l.b16 %v881
      %v983 = vunpack.c.h.b16 %v881
      %v984 = vunpack.c.l.b16 %v882
      %v985 = vunpack.c.h.b16 %v882
      %v986 = vunpack.c.l.b16 %v883
      %v987 = vunpack.c.h.b16 %v883
      %v988 = vunpack.c.l.b16 %v884
      %v989 = vunpack.c.h.b16 %v884
      %v990 = vunpack.c.l.b16 %v885
      %v991 = vunpack.c.h.b16 %v885
      %v992 = vunpack.c.l.b16 %v886
      %v993 = vunpack.c.h.b16 %v886
      %v994 = vunpack.c.l.b16 %v887
      %v995 = vunpack.c.h.b16 %v887
      %v996 = vunpack.c.l.b16 %v888
      %v997 = vunpack.c.h.b16 %v888
      %v998 = vunpack.c.l.b16 %v889
      %v999 = vunpack.c.h.b16 %v889
      %v1000 = vunpack.c.l.b16 %v890
      %v1001 = vunpack.c.h.b16 %v890
      %v1002 = vunpack.c.l.b16 %v891
      %v1003 = vunpack.c.h.b16 %v891
      %v1004 = vunpack.c.l.b16 %v892
      %v1005 = vunpack.c.h.b16 %v892
      %v1006 = vunpack.c.l.b16 %v893
      %v1007 = vunpack.c.h.b16 %v893
      %v1008 = vpack.c.b16 %v946, %v944
      %v1009 = vpack.c.b16 %v947, %v945
      %v1010 = vpack.c.b16 %v950, %v948
      %v1011 = vpack.c.b16 %v951, %v949
      %v1012 = vpack.c.b16 %v954, %v952
      %v1013 = vpack.c.b16 %v955, %v953
      %v1014 = vpack.c.b16 %v958, %v956
      %v1015 = vpack.c.b16 %v959, %v957
      %v1016 = vpack.c.b16 %v962, %v960
      %v1017 = vpack.c.b16 %v963, %v961
      %v1018 = vpack.c.b16 %v966, %v964
      %v1019 = vpack.c.b16 %v967, %v965
      %v1020 = vpack.c.b16 %v970, %v968
      %v1021 = vpack.c.b16 %v971, %v969
      %v1022 = vpack.c.b16 %v974, %v972
      %v1023 = vpack.c.b16 %v975, %v973
      %v1024 = vpack.c.b16 %v978, %v976
      %v1025 = vpack.c.b16 %v979, %v977
      %v1026 = vpack.c.b16 %v982, %v980
      %v1027 = vpack.c.b16 %v983, %v981
      %v1028 = vpack.c.b16 %v986, %v984
      %v1029 = vpack.c.b16 %v987, %v985
      %v1030 = vpack.c.b16 %v990, %v988
      %v1031 = vpack.c.b16 %v991, %v989
      %v1032 = vpack.c.b16 %v994, %v992
      %v1033 = vpack.c.b16 %v995, %v993
      %v1034 = vpack.c.b16 %v998, %v996
      %v1035 = vpack.c.b16 %v999, %v997
      %v1036 = vpack.c.b16 %v1002, %v1000
      %v1037 = vpack.c.b16 %v1003, %v1001
      %v1038 = vpack.c.b16 %v1006, %v1004
      %v1039 = vpack.c.b16 %v1007, %v1005
      %1072 = vmatprep.subr.bf16.mxu0 %v1023
      %1073 = vmatpush1.bf16.msra.mxu0 %v1022
      %1074 = vmatprep.subr.bf16.mxu0 %v1021
      %1075 = vmatpush1.bf16.msra.mxu0 %v1020
      %1076 = vmatprep.subr.bf16.mxu0 %v1019
      %1077 = vmatpush1.bf16.msra.mxu0 %v1018
      %1078 = vmatprep.subr.bf16.mxu0 %v1017
      %1079 = vmatpush1.bf16.msra.mxu0 %v1016
      %1080 = vmatprep.subr.bf16.mxu0 %v1015
      %1081 = vmatpush1.bf16.msra.mxu0 %v1014
      %1082 = vmatprep.subr.bf16.mxu0 %v1013
      %1083 = vmatpush1.bf16.msra.mxu0 %v1012
      %1084 = vmatprep.subr.bf16.mxu0 %v1011
      %1085 = vmatpush1.bf16.msra.mxu0 %v1010
      %1086 = vmatprep.subr.bf16.mxu0 %v1009
      %1087 = vmatpush1.bf16.msra.mxu0 %v1008
      %1088 = vmatprep.subr.bf16.mxu0 %v1039
      %1089 = vmatpush2.bf16.msra.mxu0 %v1038
      %1090 = vmatprep.subr.bf16.mxu0 %v1037
      %1091 = vmatpush2.bf16.msra.mxu0 %v1036
      %1092 = vmatprep.subr.bf16.mxu0 %v1035
      %1093 = vmatpush2.bf16.msra.mxu0 %v1034
      %1094 = vmatprep.subr.bf16.mxu0 %v1033
      %1095 = vmatpush2.bf16.msra.mxu0 %v1032
      %1096 = vmatprep.subr.bf16.mxu0 %v1031
      %1097 = vmatpush2.bf16.msra.mxu0 %v1030
      %1098 = vmatprep.subr.bf16.mxu0 %v1029
      %1099 = vmatpush2.bf16.msra.mxu0 %v1028
      %1100 = vmatprep.subr.bf16.mxu0 %v1027
      %1101 = vmatpush2.bf16.msra.mxu0 %v1026
      %1102 = vmatprep.subr.bf16.mxu0 %v1025
      %1103 = vmatpush2.bf16.msra.mxu0 %v1024
      %1104 = vmatprep.mubr.bf16.mxu0 %v909
      %1105 = vmatmul.mubr.bf16.gmra.mxu0 %v902
      %v1106 = vpop.f32.mrf.mxu0
      %v1107 = vadd.f32 0.0, %v1106
      %v1108 = vpop.f32.mrf.mxu0
      %v1109 = vadd.f32 0.0, %v1108
      %v1110 = vpop.f32.mrf.mxu0
      %v1111 = vpop.f32.mrf.mxu0
      %1112 = vdwg.mxu0
      %v1113 = vadd.f32 %v855, %v1107
      %v1114 = vadd.f32 %v857, %v1109
      %v1115 = vld [vmem:[%s2] sm:$0x3]
      %v1117 = vlaneseq
      %v1118 = vshrl.u32 %v1117, 7
      %v1119 = vsub.s32 0, %v1118
      %v1120 = vrot.slane %v1115, %v1119
      %v1121 = vlaneseq
      %v1122 = vshrl.u32 %v1121, 7
      %v1123 = vsub.s32 1, %v1122
      %v1124 = vrot.slane %v1115, %v1123
      %v1127 = vmul.f32 %v1113, %v1120
      %v1128 = vmul.f32 %v1114, %v1124
      %v1129 = vld [vmem:[%s3] sm:$0x3]
      %v1131 = vlaneseq
      %v1132 = vshrl.u32 %v1131, 7
      %v1133 = vsub.s32 0, %v1132
      %v1134 = vrot.slane %v1129, %v1133
      %v1135 = vlaneseq
      %v1136 = vshrl.u32 %v1135, 7
      %v1137 = vsub.s32 1, %v1136
      %v1138 = vrot.slane %v1129, %v1137
      %v1141 = vadd.f32 %v1127, %v1134
      %v1142 = vadd.f32 %v1128, %v1138
      %v1143 = vmax.f32 %v1141, 0.0
      %v1144 = vmax.f32 %v1142, 0.0
      %v1147 = vrot.slane %v1143, 7
      %v1148 = vrot.slane %v1144, 7
      %vm1151 = vcmask 1040384
      %v1152 = vsel %vm1151, 0.0, %v1147
      %v1153 = vsel %vm1151, 0.0, %v1148
      %v1154 = vsel %vm1151, %v1147, 0.0
      %v1155 = vsel %vm1151, %v1148, 0.0
      %v1156 = vpack.c.bf16 %v1152, %v1152
      %v1157 = vpack.c.bf16 %v1153, %v1153
      %v1158 = vld [vmem:[%s4] sm:$0xff]
      %v1159 = vld [vmem:[%s4 + $0x8] sm:$0xff]
      %v1160 = vld [vmem:[%s4 + $0x10] sm:$0xff]
      %v1161 = vld [vmem:[%s4 + $0x18] sm:$0xff]
      %v1162 = vld [vmem:[%s4 + $0x20] sm:$0xff]
      %v1163 = vld [vmem:[%s4 + $0x28] sm:$0xff]
      %v1164 = vld [vmem:[%s4 + $0x30] sm:$0xff]
      %v1165 = vld [vmem:[%s4 + $0x38] sm:$0xff]
      %v1166 = vld [vmem:[%s4 + $0x40] sm:$0xff]
      %v1167 = vld [vmem:[%s4 + $0x48] sm:$0xff]
      %v1168 = vld [vmem:[%s4 + $0x50] sm:$0xff]
      %v1169 = vld [vmem:[%s4 + $0x58] sm:$0xff]
      %v1170 = vld [vmem:[%s4 + $0x60] sm:$0xff]
      %v1171 = vld [vmem:[%s4 + $0x68] sm:$0xff]
      %v1172 = vld [vmem:[%s4 + $0x70] sm:$0xff]
      %v1173 = vld [vmem:[%s4 + $0x78] sm:$0xff]
      %v1174 = vld [vmem:[%s4 + $0x80] sm:$0xff]
      %v1175 = vld [vmem:[%s4 + $0x88] sm:$0xff]
      %v1176 = vld [vmem:[%s4 + $0x90] sm:$0xff]
      %v1177 = vld [vmem:[%s4 + $0x98] sm:$0xff]
      %v1178 = vld [vmem:[%s4 + $0xa0] sm:$0xff]
      %v1179 = vld [vmem:[%s4 + $0xa8] sm:$0xff]
      %v1180 = vld [vmem:[%s4 + $0xb0] sm:$0xff]
      %v1181 = vld [vmem:[%s4 + $0xb8] sm:$0xff]
      %v1182 = vld [vmem:[%s4 + $0xc0] sm:$0xff]
      %v1183 = vld [vmem:[%s4 + $0xc8] sm:$0xff]
      %v1184 = vld [vmem:[%s4 + $0xd0] sm:$0xff]
      %v1185 = vld [vmem:[%s4 + $0xd8] sm:$0xff]
      %v1186 = vld [vmem:[%s4 + $0xe0] sm:$0xff]
      %v1187 = vld [vmem:[%s4 + $0xe8] sm:$0xff]
      %v1188 = vld [vmem:[%s4 + $0xf0] sm:$0xff]
      %v1189 = vld [vmem:[%s4 + $0xf8] sm:$0xff]
      %v1190 = vpack.c.bf16 %v1154, %v1152
      %v1191 = vpack.c.bf16 %v1155, %v1153
      %s1192 = scalar_lea.vmem %s4, 256
      %v1193 = vld [vmem:[%s1192] sm:$0xff]
      %v1194 = vld [vmem:[%s1192 + $0x8] sm:$0xff]
      %v1195 = vld [vmem:[%s1192 + $0x10] sm:$0xff]
      %v1196 = vld [vmem:[%s1192 + $0x18] sm:$0xff]
      %v1197 = vld [vmem:[%s1192 + $0x20] sm:$0xff]
      %v1198 = vld [vmem:[%s1192 + $0x28] sm:$0xff]
      %v1199 = vld [vmem:[%s1192 + $0x30] sm:$0xff]
      %v1200 = vld [vmem:[%s1192 + $0x38] sm:$0xff]
      %v1201 = vld [vmem:[%s1192 + $0x40] sm:$0xff]
      %v1202 = vld [vmem:[%s1192 + $0x48] sm:$0xff]
      %v1203 = vld [vmem:[%s1192 + $0x50] sm:$0xff]
      %v1204 = vld [vmem:[%s1192 + $0x58] sm:$0xff]
      %v1205 = vld [vmem:[%s1192 + $0x60] sm:$0xff]
      %v1206 = vld [vmem:[%s1192 + $0x68] sm:$0xff]
      %v1207 = vld [vmem:[%s1192 + $0x70] sm:$0xff]
      %v1208 = vld [vmem:[%s1192 + $0x78] sm:$0xff]
      %v1209 = vld [vmem:[%s1192 + $0x80] sm:$0xff]
      %v1210 = vld [vmem:[%s1192 + $0x88] sm:$0xff]
      %v1211 = vld [vmem:[%s1192 + $0x90] sm:$0xff]
      %v1212 = vld [vmem:[%s1192 + $0x98] sm:$0xff]
      %v1213 = vld [vmem:[%s1192 + $0xa0] sm:$0xff]
      %v1214 = vld [vmem:[%s1192 + $0xa8] sm:$0xff]
      %v1215 = vld [vmem:[%s1192 + $0xb0] sm:$0xff]
      %v1216 = vld [vmem:[%s1192 + $0xb8] sm:$0xff]
      %v1217 = vld [vmem:[%s1192 + $0xc0] sm:$0xff]
      %v1218 = vld [vmem:[%s1192 + $0xc8] sm:$0xff]
      %v1219 = vld [vmem:[%s1192 + $0xd0] sm:$0xff]
      %v1220 = vld [vmem:[%s1192 + $0xd8] sm:$0xff]
      %v1221 = vld [vmem:[%s1192 + $0xe0] sm:$0xff]
      %v1222 = vld [vmem:[%s1192 + $0xe8] sm:$0xff]
      %v1223 = vld [vmem:[%s1192 + $0xf0] sm:$0xff]
      %v1224 = vld [vmem:[%s1192 + $0xf8] sm:$0xff]
      %v1226 = vshrl.u32 %v1190, 16
      %v1228 = vshll.u32 %v1190, 16
      %v1230 = vrot.slane %v1228, 1
      %v1231 = vor.u32 %v1226, %v1230
      %v1233 = vshrl.u32 %v1191, 16
      %v1235 = vshll.u32 %v1191, 16
      %v1237 = vrot.slane %v1235, 1
      %v1238 = vor.u32 %v1233, %v1237
      %v1273 = vunpack.c.l.b16 %v1193
      %v1274 = vunpack.c.h.b16 %v1193
      %v1275 = vunpack.c.l.b16 %v1194
      %v1276 = vunpack.c.h.b16 %v1194
      %v1277 = vunpack.c.l.b16 %v1195
      %v1278 = vunpack.c.h.b16 %v1195
      %v1279 = vunpack.c.l.b16 %v1196
      %v1280 = vunpack.c.h.b16 %v1196
      %v1281 = vunpack.c.l.b16 %v1197
      %v1282 = vunpack.c.h.b16 %v1197
      %v1283 = vunpack.c.l.b16 %v1198
      %v1284 = vunpack.c.h.b16 %v1198
      %v1285 = vunpack.c.l.b16 %v1199
      %v1286 = vunpack.c.h.b16 %v1199
      %v1287 = vunpack.c.l.b16 %v1200
      %v1288 = vunpack.c.h.b16 %v1200
      %v1289 = vunpack.c.l.b16 %v1201
      %v1290 = vunpack.c.h.b16 %v1201
      %v1291 = vunpack.c.l.b16 %v1202
      %v1292 = vunpack.c.h.b16 %v1202
      %v1293 = vunpack.c.l.b16 %v1203
      %v1294 = vunpack.c.h.b16 %v1203
      %v1295 = vunpack.c.l.b16 %v1204
      %v1296 = vunpack.c.h.b16 %v1204
      %v1297 = vunpack.c.l.b16 %v1205
      %v1298 = vunpack.c.h.b16 %v1205
      %v1299 = vunpack.c.l.b16 %v1206
      %v1300 = vunpack.c.h.b16 %v1206
      %v1301 = vunpack.c.l.b16 %v1207
      %v1302 = vunpack.c.h.b16 %v1207
      %v1303 = vunpack.c.l.b16 %v1208
      %v1304 = vunpack.c.h.b16 %v1208
      %v1305 = vunpack.c.l.b16 %v1209
      %v1306 = vunpack.c.h.b16 %v1209
      %v1307 = vunpack.c.l.b16 %v1210
      %v1308 = vunpack.c.h.b16 %v1210
      %v1309 = vunpack.c.l.b16 %v1211
      %v1310 = vunpack.c.h.b16 %v1211
      %v1311 = vunpack.c.l.b16 %v1212
      %v1312 = vunpack.c.h.b16 %v1212
      %v1313 = vunpack.c.l.b16 %v1213
      %v1314 = vunpack.c.h.b16 %v1213
      %v1315 = vunpack.c.l.b16 %v1214
      %v1316 = vunpack.c.h.b16 %v1214
      %v1317 = vunpack.c.l.b16 %v1215
      %v1318 = vunpack.c.h.b16 %v1215
      %v1319 = vunpack.c.l.b16 %v1216
      %v1320 = vunpack.c.h.b16 %v1216
      %v1321 = vunpack.c.l.b16 %v1217
      %v1322 = vunpack.c.h.b16 %v1217
      %v1323 = vunpack.c.l.b16 %v1218
      %v1324 = vunpack.c.h.b16 %v1218
      %v1325 = vunpack.c.l.b16 %v1219
      %v1326 = vunpack.c.h.b16 %v1219
      %v1327 = vunpack.c.l.b16 %v1220
      %v1328 = vunpack.c.h.b16 %v1220
      %v1329 = vunpack.c.l.b16 %v1221
      %v1330 = vunpack.c.h.b16 %v1221
      %v1331 = vunpack.c.l.b16 %v1222
      %v1332 = vunpack.c.h.b16 %v1222
      %v1333 = vunpack.c.l.b16 %v1223
      %v1334 = vunpack.c.h.b16 %v1223
      %v1335 = vunpack.c.l.b16 %v1224
      %v1336 = vunpack.c.h.b16 %v1224
      %v1337 = vpack.c.b16 %v1275, %v1273
      %v1338 = vpack.c.b16 %v1276, %v1274
      %v1339 = vpack.c.b16 %v1279, %v1277
      %v1340 = vpack.c.b16 %v1280, %v1278
      %v1341 = vpack.c.b16 %v1283, %v1281
      %v1342 = vpack.c.b16 %v1284, %v1282
      %v1343 = vpack.c.b16 %v1287, %v1285
      %v1344 = vpack.c.b16 %v1288, %v1286
      %v1345 = vpack.c.b16 %v1291, %v1289
      %v1346 = vpack.c.b16 %v1292, %v1290
      %v1347 = vpack.c.b16 %v1295, %v1293
      %v1348 = vpack.c.b16 %v1296, %v1294
      %v1349 = vpack.c.b16 %v1299, %v1297
      %v1350 = vpack.c.b16 %v1300, %v1298
      %v1351 = vpack.c.b16 %v1303, %v1301
      %v1352 = vpack.c.b16 %v1304, %v1302
      %v1353 = vpack.c.b16 %v1307, %v1305
      %v1354 = vpack.c.b16 %v1308, %v1306
      %v1355 = vpack.c.b16 %v1311, %v1309
      %v1356 = vpack.c.b16 %v1312, %v1310
      %v1357 = vpack.c.b16 %v1315, %v1313
      %v1358 = vpack.c.b16 %v1316, %v1314
      %v1359 = vpack.c.b16 %v1319, %v1317
      %v1360 = vpack.c.b16 %v1320, %v1318
      %v1361 = vpack.c.b16 %v1323, %v1321
      %v1362 = vpack.c.b16 %v1324, %v1322
      %v1363 = vpack.c.b16 %v1327, %v1325
      %v1364 = vpack.c.b16 %v1328, %v1326
      %v1365 = vpack.c.b16 %v1331, %v1329
      %v1366 = vpack.c.b16 %v1332, %v1330
      %v1367 = vpack.c.b16 %v1335, %v1333
      %v1368 = vpack.c.b16 %v1336, %v1334
      %1401 = vmatprep.subr.bf16.mxu0 %v1352
      %1402 = vmatpush1.bf16.msra.mxu0 %v1351
      %1403 = vmatprep.subr.bf16.mxu0 %v1350
      %1404 = vmatpush1.bf16.msra.mxu0 %v1349
      %1405 = vmatprep.subr.bf16.mxu0 %v1348
      %1406 = vmatpush1.bf16.msra.mxu0 %v1347
      %1407 = vmatprep.subr.bf16.mxu0 %v1346
      %1408 = vmatpush1.bf16.msra.mxu0 %v1345
      %1409 = vmatprep.subr.bf16.mxu0 %v1344
      %1410 = vmatpush1.bf16.msra.mxu0 %v1343
      %1411 = vmatprep.subr.bf16.mxu0 %v1342
      %1412 = vmatpush1.bf16.msra.mxu0 %v1341
      %1413 = vmatprep.subr.bf16.mxu0 %v1340
      %1414 = vmatpush1.bf16.msra.mxu0 %v1339
      %1415 = vmatprep.subr.bf16.mxu0 %v1338
      %1416 = vmatpush1.bf16.msra.mxu0 %v1337
      %1417 = vmatprep.subr.bf16.mxu0 %v1368
      %1418 = vmatpush2.bf16.msra.mxu0 %v1367
      %1419 = vmatprep.subr.bf16.mxu0 %v1366
      %1420 = vmatpush2.bf16.msra.mxu0 %v1365
      %1421 = vmatprep.subr.bf16.mxu0 %v1364
      %1422 = vmatpush2.bf16.msra.mxu0 %v1363
      %1423 = vmatprep.subr.bf16.mxu0 %v1362
      %1424 = vmatpush2.bf16.msra.mxu0 %v1361
      %1425 = vmatprep.subr.bf16.mxu0 %v1360
      %1426 = vmatpush2.bf16.msra.mxu0 %v1359
      %1427 = vmatprep.subr.bf16.mxu0 %v1358
      %1428 = vmatpush2.bf16.msra.mxu0 %v1357
      %1429 = vmatprep.subr.bf16.mxu0 %v1356
      %1430 = vmatpush2.bf16.msra.mxu0 %v1355
      %1431 = vmatprep.subr.bf16.mxu0 %v1354
      %1432 = vmatpush2.bf16.msra.mxu0 %v1353
      %1433 = vmatprep.mubr.bf16.mxu0 %v1238
      %1434 = vmatmul.mubr.bf16.gmra.mxu0 %v1231
      %v1435 = vpop.f32.mrf.mxu0
      %v1436 = vadd.f32 0.0, %v1435
      %v1437 = vpop.f32.mrf.mxu0
      %v1438 = vadd.f32 0.0, %v1437
      %v1439 = vpop.f32.mrf.mxu0
      %v1440 = vpop.f32.mrf.mxu0
      %1441 = vdwg.mxu0
      %v1474 = vunpack.c.l.b16 %v1158
      %v1475 = vunpack.c.h.b16 %v1158
      %v1476 = vunpack.c.l.b16 %v1159
      %v1477 = vunpack.c.h.b16 %v1159
      %v1478 = vunpack.c.l.b16 %v1160
      %v1479 = vunpack.c.h.b16 %v1160
      %v1480 = vunpack.c.l.b16 %v1161
      %v1481 = vunpack.c.h.b16 %v1161
      %v1482 = vunpack.c.l.b16 %v1162
      %v1483 = vunpack.c.h.b16 %v1162
      %v1484 = vunpack.c.l.b16 %v1163
      %v1485 = vunpack.c.h.b16 %v1163
      %v1486 = vunpack.c.l.b16 %v1164
      %v1487 = vunpack.c.h.b16 %v1164
      %v1488 = vunpack.c.l.b16 %v1165
      %v1489 = vunpack.c.h.b16 %v1165
      %v1490 = vunpack.c.l.b16 %v1166
      %v1491 = vunpack.c.h.b16 %v1166
      %v1492 = vunpack.c.l.b16 %v1167
      %v1493 = vunpack.c.h.b16 %v1167
      %v1494 = vunpack.c.l.b16 %v1168
      %v1495 = vunpack.c.h.b16 %v1168
      %v1496 = vunpack.c.l.b16 %v1169
      %v1497 = vunpack.c.h.b16 %v1169
      %v1498 = vunpack.c.l.b16 %v1170
      %v1499 = vunpack.c.h.b16 %v1170
      %v1500 = vunpack.c.l.b16 %v1171
      %v1501 = vunpack.c.h.b16 %v1171
      %v1502 = vunpack.c.l.b16 %v1172
      %v1503 = vunpack.c.h.b16 %v1172
      %v1504 = vunpack.c.l.b16 %v1173
      %v1505 = vunpack.c.h.b16 %v1173
      %v1506 = vunpack.c.l.b16 %v1174
      %v1507 = vunpack.c.h.b16 %v1174
      %v1508 = vunpack.c.l.b16 %v1175
      %v1509 = vunpack.c.h.b16 %v1175
      %v1510 = vunpack.c.l.b16 %v1176
      %v1511 = vunpack.c.h.b16 %v1176
      %v1512 = vunpack.c.l.b16 %v1177
      %v1513 = vunpack.c.h.b16 %v1177
      %v1514 = vunpack.c.l.b16 %v1178
      %v1515 = vunpack.c.h.b16 %v1178
      %v1516 = vunpack.c.l.b16 %v1179
      %v1517 = vunpack.c.h.b16 %v1179
      %v1518 = vunpack.c.l.b16 %v1180
      %v1519 = vunpack.c.h.b16 %v1180
      %v1520 = vunpack.c.l.b16 %v1181
      %v1521 = vunpack.c.h.b16 %v1181
      %v1522 = vunpack.c.l.b16 %v1182
      %v1523 = vunpack.c.h.b16 %v1182
      %v1524 = vunpack.c.l.b16 %v1183
      %v1525 = vunpack.c.h.b16 %v1183
      %v1526 = vunpack.c.l.b16 %v1184
      %v1527 = vunpack.c.h.b16 %v1184
      %v1528 = vunpack.c.l.b16 %v1185
      %v1529 = vunpack.c.h.b16 %v1185
      %v1530 = vunpack.c.l.b16 %v1186
      %v1531 = vunpack.c.h.b16 %v1186
      %v1532 = vunpack.c.l.b16 %v1187
      %v1533 = vunpack.c.h.b16 %v1187
      %v1534 = vunpack.c.l.b16 %v1188
      %v1535 = vunpack.c.h.b16 %v1188
      %v1536 = vunpack.c.l.b16 %v1189
      %v1537 = vunpack.c.h.b16 %v1189
      %v1538 = vpack.c.b16 %v1476, %v1474
      %v1539 = vpack.c.b16 %v1477, %v1475
      %v1540 = vpack.c.b16 %v1480, %v1478
      %v1541 = vpack.c.b16 %v1481, %v1479
      %v1542 = vpack.c.b16 %v1484, %v1482
      %v1543 = vpack.c.b16 %v1485, %v1483
      %v1544 = vpack.c.b16 %v1488, %v1486
      %v1545 = vpack.c.b16 %v1489, %v1487
      %v1546 = vpack.c.b16 %v1492, %v1490
      %v1547 = vpack.c.b16 %v1493, %v1491
      %v1548 = vpack.c.b16 %v1496, %v1494
      %v1549 = vpack.c.b16 %v1497, %v1495
      %v1550 = vpack.c.b16 %v1500, %v1498
      %v1551 = vpack.c.b16 %v1501, %v1499
      %v1552 = vpack.c.b16 %v1504, %v1502
      %v1553 = vpack.c.b16 %v1505, %v1503
      %v1554 = vpack.c.b16 %v1508, %v1506
      %v1555 = vpack.c.b16 %v1509, %v1507
      %v1556 = vpack.c.b16 %v1512, %v1510
      %v1557 = vpack.c.b16 %v1513, %v1511
      %v1558 = vpack.c.b16 %v1516, %v1514
      %v1559 = vpack.c.b16 %v1517, %v1515
      %v1560 = vpack.c.b16 %v1520, %v1518
      %v1561 = vpack.c.b16 %v1521, %v1519
      %v1562 = vpack.c.b16 %v1524, %v1522
      %v1563 = vpack.c.b16 %v1525, %v1523
      %v1564 = vpack.c.b16 %v1528, %v1526
      %v1565 = vpack.c.b16 %v1529, %v1527
      %v1566 = vpack.c.b16 %v1532, %v1530
      %v1567 = vpack.c.b16 %v1533, %v1531
      %v1568 = vpack.c.b16 %v1536, %v1534
      %v1569 = vpack.c.b16 %v1537, %v1535
      %1602 = vmatprep.subr.bf16.mxu0 %v1553
      %1603 = vmatpush1.bf16.msra.mxu0 %v1552
      %1604 = vmatprep.subr.bf16.mxu0 %v1551
      %1605 = vmatpush1.bf16.msra.mxu0 %v1550
      %1606 = vmatprep.subr.bf16.mxu0 %v1549
      %1607 = vmatpush1.bf16.msra.mxu0 %v1548
      %1608 = vmatprep.subr.bf16.mxu0 %v1547
      %1609 = vmatpush1.bf16.msra.mxu0 %v1546
      %1610 = vmatprep.subr.bf16.mxu0 %v1545
      %1611 = vmatpush1.bf16.msra.mxu0 %v1544
      %1612 = vmatprep.subr.bf16.mxu0 %v1543
      %1613 = vmatpush1.bf16.msra.mxu0 %v1542
      %1614 = vmatprep.subr.bf16.mxu0 %v1541
      %1615 = vmatpush1.bf16.msra.mxu0 %v1540
      %1616 = vmatprep.subr.bf16.mxu0 %v1539
      %1617 = vmatpush1.bf16.msra.mxu0 %v1538
      %1618 = vmatprep.subr.bf16.mxu0 %v1569
      %1619 = vmatpush2.bf16.msra.mxu0 %v1568
      %1620 = vmatprep.subr.bf16.mxu0 %v1567
      %1621 = vmatpush2.bf16.msra.mxu0 %v1566
      %1622 = vmatprep.subr.bf16.mxu0 %v1565
      %1623 = vmatpush2.bf16.msra.mxu0 %v1564
      %1624 = vmatprep.subr.bf16.mxu0 %v1563
      %1625 = vmatpush2.bf16.msra.mxu0 %v1562
      %1626 = vmatprep.subr.bf16.mxu0 %v1561
      %1627 = vmatpush2.bf16.msra.mxu0 %v1560
      %1628 = vmatprep.subr.bf16.mxu0 %v1559
      %1629 = vmatpush2.bf16.msra.mxu0 %v1558
      %1630 = vmatprep.subr.bf16.mxu0 %v1557
      %1631 = vmatpush2.bf16.msra.mxu0 %v1556
      %1632 = vmatprep.subr.bf16.mxu0 %v1555
      %1633 = vmatpush2.bf16.msra.mxu0 %v1554
      %1634 = vmatprep.mubr.bf16.mxu0 %v1157
      %1635 = vmatmul.mubr.bf16.gmra.mxu0 %v1156
      %v1636 = vpop.f32.mrf.mxu0
      %v1637 = vadd.f32 %v1436, %v1636
      %v1638 = vpop.f32.mrf.mxu0
      %v1639 = vadd.f32 %v1438, %v1638
      %v1640 = vpop.f32.mrf.mxu0
      %v1641 = vpop.f32.mrf.mxu0
      %1642 = vdwg.mxu0
      %s1643 = scalar_lea.vmem %s4, 512
      %v1644 = vld [vmem:[%s1643] sm:$0xff]
      %v1645 = vld [vmem:[%s1643 + $0x8] sm:$0xff]
      %v1646 = vld [vmem:[%s1643 + $0x10] sm:$0xff]
      %v1647 = vld [vmem:[%s1643 + $0x18] sm:$0xff]
      %v1648 = vld [vmem:[%s1643 + $0x20] sm:$0xff]
      %v1649 = vld [vmem:[%s1643 + $0x28] sm:$0xff]
      %v1650 = vld [vmem:[%s1643 + $0x30] sm:$0xff]
      %v1651 = vld [vmem:[%s1643 + $0x38] sm:$0xff]
      %v1652 = vld [vmem:[%s1643 + $0x40] sm:$0xff]
      %v1653 = vld [vmem:[%s1643 + $0x48] sm:$0xff]
      %v1654 = vld [vmem:[%s1643 + $0x50] sm:$0xff]
      %v1655 = vld [vmem:[%s1643 + $0x58] sm:$0xff]
      %v1656 = vld [vmem:[%s1643 + $0x60] sm:$0xff]
      %v1657 = vld [vmem:[%s1643 + $0x68] sm:$0xff]
      %v1658 = vld [vmem:[%s1643 + $0x70] sm:$0xff]
      %v1659 = vld [vmem:[%s1643 + $0x78] sm:$0xff]
      %v1660 = vld [vmem:[%s1643 + $0x80] sm:$0xff]
      %v1661 = vld [vmem:[%s1643 + $0x88] sm:$0xff]
      %v1662 = vld [vmem:[%s1643 + $0x90] sm:$0xff]
      %v1663 = vld [vmem:[%s1643 + $0x98] sm:$0xff]
      %v1664 = vld [vmem:[%s1643 + $0xa0] sm:$0xff]
      %v1665 = vld [vmem:[%s1643 + $0xa8] sm:$0xff]
      %v1666 = vld [vmem:[%s1643 + $0xb0] sm:$0xff]
      %v1667 = vld [vmem:[%s1643 + $0xb8] sm:$0xff]
      %v1668 = vld [vmem:[%s1643 + $0xc0] sm:$0xff]
      %v1669 = vld [vmem:[%s1643 + $0xc8] sm:$0xff]
      %v1670 = vld [vmem:[%s1643 + $0xd0] sm:$0xff]
      %v1671 = vld [vmem:[%s1643 + $0xd8] sm:$0xff]
      %v1672 = vld [vmem:[%s1643 + $0xe0] sm:$0xff]
      %v1673 = vld [vmem:[%s1643 + $0xe8] sm:$0xff]
      %v1674 = vld [vmem:[%s1643 + $0xf0] sm:$0xff]
      %v1675 = vld [vmem:[%s1643 + $0xf8] sm:$0xff]
      %v1678 = vrot.slane %v1190, 1
      %v1679 = vrot.slane %v1191, 1
      %v1714 = vunpack.c.l.b16 %v1644
      %v1715 = vunpack.c.h.b16 %v1644
      %v1716 = vunpack.c.l.b16 %v1645
      %v1717 = vunpack.c.h.b16 %v1645
      %v1718 = vunpack.c.l.b16 %v1646
      %v1719 = vunpack.c.h.b16 %v1646
      %v1720 = vunpack.c.l.b16 %v1647
      %v1721 = vunpack.c.h.b16 %v1647
      %v1722 = vunpack.c.l.b16 %v1648
      %v1723 = vunpack.c.h.b16 %v1648
      %v1724 = vunpack.c.l.b16 %v1649
      %v1725 = vunpack.c.h.b16 %v1649
      %v1726 = vunpack.c.l.b16 %v1650
      %v1727 = vunpack.c.h.b16 %v1650
      %v1728 = vunpack.c.l.b16 %v1651
      %v1729 = vunpack.c.h.b16 %v1651
      %v1730 = vunpack.c.l.b16 %v1652
      %v1731 = vunpack.c.h.b16 %v1652
      %v1732 = vunpack.c.l.b16 %v1653
      %v1733 = vunpack.c.h.b16 %v1653
      %v1734 = vunpack.c.l.b16 %v1654
      %v1735 = vunpack.c.h.b16 %v1654
      %v1736 = vunpack.c.l.b16 %v1655
      %v1737 = vunpack.c.h.b16 %v1655
      %v1738 = vunpack.c.l.b16 %v1656
      %v1739 = vunpack.c.h.b16 %v1656
      %v1740 = vunpack.c.l.b16 %v1657
      %v1741 = vunpack.c.h.b16 %v1657
      %v1742 = vunpack.c.l.b16 %v1658
      %v1743 = vunpack.c.h.b16 %v1658
      %v1744 = vunpack.c.l.b16 %v1659
      %v1745 = vunpack.c.h.b16 %v1659
      %v1746 = vunpack.c.l.b16 %v1660
      %v1747 = vunpack.c.h.b16 %v1660
      %v1748 = vunpack.c.l.b16 %v1661
      %v1749 = vunpack.c.h.b16 %v1661
      %v1750 = vunpack.c.l.b16 %v1662
      %v1751 = vunpack.c.h.b16 %v1662
      %v1752 = vunpack.c.l.b16 %v1663
      %v1753 = vunpack.c.h.b16 %v1663
      %v1754 = vunpack.c.l.b16 %v1664
      %v1755 = vunpack.c.h.b16 %v1664
      %v1756 = vunpack.c.l.b16 %v1665
      %v1757 = vunpack.c.h.b16 %v1665
      %v1758 = vunpack.c.l.b16 %v1666
      %v1759 = vunpack.c.h.b16 %v1666
      %v1760 = vunpack.c.l.b16 %v1667
      %v1761 = vunpack.c.h.b16 %v1667
      %v1762 = vunpack.c.l.b16 %v1668
      %v1763 = vunpack.c.h.b16 %v1668
      %v1764 = vunpack.c.l.b16 %v1669
      %v1765 = vunpack.c.h.b16 %v1669
      %v1766 = vunpack.c.l.b16 %v1670
      %v1767 = vunpack.c.h.b16 %v1670
      %v1768 = vunpack.c.l.b16 %v1671
      %v1769 = vunpack.c.h.b16 %v1671
      %v1770 = vunpack.c.l.b16 %v1672
      %v1771 = vunpack.c.h.b16 %v1672
      %v1772 = vunpack.c.l.b16 %v1673
      %v1773 = vunpack.c.h.b16 %v1673
      %v1774 = vunpack.c.l.b16 %v1674
      %v1775 = vunpack.c.h.b16 %v1674
      %v1776 = vunpack.c.l.b16 %v1675
      %v1777 = vunpack.c.h.b16 %v1675
      %v1778 = vpack.c.b16 %v1716, %v1714
      %v1779 = vpack.c.b16 %v1717, %v1715
      %v1780 = vpack.c.b16 %v1720, %v1718
      %v1781 = vpack.c.b16 %v1721, %v1719
      %v1782 = vpack.c.b16 %v1724, %v1722
      %v1783 = vpack.c.b16 %v1725, %v1723
      %v1784 = vpack.c.b16 %v1728, %v1726
      %v1785 = vpack.c.b16 %v1729, %v1727
      %v1786 = vpack.c.b16 %v1732, %v1730
      %v1787 = vpack.c.b16 %v1733, %v1731
      %v1788 = vpack.c.b16 %v1736, %v1734
      %v1789 = vpack.c.b16 %v1737, %v1735
      %v1790 = vpack.c.b16 %v1740, %v1738
      %v1791 = vpack.c.b16 %v1741, %v1739
      %v1792 = vpack.c.b16 %v1744, %v1742
      %v1793 = vpack.c.b16 %v1745, %v1743
      %v1794 = vpack.c.b16 %v1748, %v1746
      %v1795 = vpack.c.b16 %v1749, %v1747
      %v1796 = vpack.c.b16 %v1752, %v1750
      %v1797 = vpack.c.b16 %v1753, %v1751
      %v1798 = vpack.c.b16 %v1756, %v1754
      %v1799 = vpack.c.b16 %v1757, %v1755
      %v1800 = vpack.c.b16 %v1760, %v1758
      %v1801 = vpack.c.b16 %v1761, %v1759
      %v1802 = vpack.c.b16 %v1764, %v1762
      %v1803 = vpack.c.b16 %v1765, %v1763
      %v1804 = vpack.c.b16 %v1768, %v1766
      %v1805 = vpack.c.b16 %v1769, %v1767
      %v1806 = vpack.c.b16 %v1772, %v1770
      %v1807 = vpack.c.b16 %v1773, %v1771
      %v1808 = vpack.c.b16 %v1776, %v1774
      %v1809 = vpack.c.b16 %v1777, %v1775
      %1842 = vmatprep.subr.bf16.mxu0 %v1793
      %1843 = vmatpush1.bf16.msra.mxu0 %v1792
      %1844 = vmatprep.subr.bf16.mxu0 %v1791
      %1845 = vmatpush1.bf16.msra.mxu0 %v1790
      %1846 = vmatprep.subr.bf16.mxu0 %v1789
      %1847 = vmatpush1.bf16.msra.mxu0 %v1788
      %1848 = vmatprep.subr.bf16.mxu0 %v1787
      %1849 = vmatpush1.bf16.msra.mxu0 %v1786
      %1850 = vmatprep.subr.bf16.mxu0 %v1785
      %1851 = vmatpush1.bf16.msra.mxu0 %v1784
      %1852 = vmatprep.subr.bf16.mxu0 %v1783
      %1853 = vmatpush1.bf16.msra.mxu0 %v1782
      %1854 = vmatprep.subr.bf16.mxu0 %v1781
      %1855 = vmatpush1.bf16.msra.mxu0 %v1780
      %1856 = vmatprep.subr.bf16.mxu0 %v1779
      %1857 = vmatpush1.bf16.msra.mxu0 %v1778
      %1858 = vmatprep.subr.bf16.mxu0 %v1809
      %1859 = vmatpush2.bf16.msra.mxu0 %v1808
      %1860 = vmatprep.subr.bf16.mxu0 %v1807
      %1861 = vmatpush2.bf16.msra.mxu0 %v1806
      %1862 = vmatprep.subr.bf16.mxu0 %v1805
      %1863 = vmatpush2.bf16.msra.mxu0 %v1804
      %1864 = vmatprep.subr.bf16.mxu0 %v1803
      %1865 = vmatpush2.bf16.msra.mxu0 %v1802
      %1866 = vmatprep.subr.bf16.mxu0 %v1801
      %1867 = vmatpush2.bf16.msra.mxu0 %v1800
      %1868 = vmatprep.subr.bf16.mxu0 %v1799
      %1869 = vmatpush2.bf16.msra.mxu0 %v1798
      %1870 = vmatprep.subr.bf16.mxu0 %v1797
      %1871 = vmatpush2.bf16.msra.mxu0 %v1796
      %1872 = vmatprep.subr.bf16.mxu0 %v1795
      %1873 = vmatpush2.bf16.msra.mxu0 %v1794
      %1874 = vmatprep.mubr.bf16.mxu0 %v1679
      %1875 = vmatmul.mubr.bf16.gmra.mxu0 %v1678
      %v1876 = vpop.f32.mrf.mxu0
      %v1877 = vadd.f32 0.0, %v1876
      %v1878 = vpop.f32.mrf.mxu0
      %v1879 = vadd.f32 0.0, %v1878
      %v1880 = vpop.f32.mrf.mxu0
      %v1881 = vpop.f32.mrf.mxu0
      %1882 = vdwg.mxu0
      %v1883 = vadd.f32 %v1637, %v1877
      %v1884 = vadd.f32 %v1639, %v1879
      %v1885 = vld [vmem:[%s5] sm:$0x3]
      %v1887 = vlaneseq
      %v1888 = vshrl.u32 %v1887, 7
      %v1889 = vsub.s32 0, %v1888
      %v1890 = vrot.slane %v1885, %v1889
      %v1891 = vlaneseq
      %v1892 = vshrl.u32 %v1891, 7
      %v1893 = vsub.s32 1, %v1892
      %v1894 = vrot.slane %v1885, %v1893
      %v1897 = vmul.f32 %v1883, %v1890
      %v1898 = vmul.f32 %v1884, %v1894
      %v1899 = vld [vmem:[%s6] sm:$0x3]
      %v1901 = vlaneseq
      %v1902 = vshrl.u32 %v1901, 7
      %v1903 = vsub.s32 0, %v1902
      %v1904 = vrot.slane %v1899, %v1903
      %v1905 = vlaneseq
      %v1906 = vshrl.u32 %v1905, 7
      %v1907 = vsub.s32 1, %v1906
      %v1908 = vrot.slane %v1899, %v1907
      %v1911 = vadd.f32 %v1897, %v1904
      %v1912 = vadd.f32 %v1898, %v1908
      %v1913 = vld [vmem:[%s7] sm:$0xff]
      %v1914 = vld [vmem:[%s7 + $0x8] sm:$0xff]
      %v1915 = vld [vmem:[%s7 + $0x10] sm:$0xff]
      %v1916 = vld [vmem:[%s7 + $0x18] sm:$0xff]
      %v1917 = vld [vmem:[%s7 + $0x20] sm:$0xff]
      %v1918 = vld [vmem:[%s7 + $0x28] sm:$0xff]
      %v1919 = vld [vmem:[%s7 + $0x30] sm:$0xff]
      %v1920 = vld [vmem:[%s7 + $0x38] sm:$0xff]
      %v1921 = vld [vmem:[%s7 + $0x40] sm:$0xff]
      %v1922 = vld [vmem:[%s7 + $0x48] sm:$0xff]
      %v1923 = vld [vmem:[%s7 + $0x50] sm:$0xff]
      %v1924 = vld [vmem:[%s7 + $0x58] sm:$0xff]
      %v1925 = vld [vmem:[%s7 + $0x60] sm:$0xff]
      %v1926 = vld [vmem:[%s7 + $0x68] sm:$0xff]
      %v1927 = vld [vmem:[%s7 + $0x70] sm:$0xff]
      %v1928 = vld [vmem:[%s7 + $0x78] sm:$0xff]
      %v1929 = vld [vmem:[%s7 + $0x80] sm:$0xff]
      %v1930 = vld [vmem:[%s7 + $0x88] sm:$0xff]
      %v1931 = vld [vmem:[%s7 + $0x90] sm:$0xff]
      %v1932 = vld [vmem:[%s7 + $0x98] sm:$0xff]
      %v1933 = vld [vmem:[%s7 + $0xa0] sm:$0xff]
      %v1934 = vld [vmem:[%s7 + $0xa8] sm:$0xff]
      %v1935 = vld [vmem:[%s7 + $0xb0] sm:$0xff]
      %v1936 = vld [vmem:[%s7 + $0xb8] sm:$0xff]
      %v1937 = vld [vmem:[%s7 + $0xc0] sm:$0xff]
      %v1938 = vld [vmem:[%s7 + $0xc8] sm:$0xff]
      %v1939 = vld [vmem:[%s7 + $0xd0] sm:$0xff]
      %v1940 = vld [vmem:[%s7 + $0xd8] sm:$0xff]
      %v1941 = vld [vmem:[%s7 + $0xe0] sm:$0xff]
      %v1942 = vld [vmem:[%s7 + $0xe8] sm:$0xff]
      %v1943 = vld [vmem:[%s7 + $0xf0] sm:$0xff]
      %v1944 = vld [vmem:[%s7 + $0xf8] sm:$0xff]
      %v1977 = vunpack.c.l.b16 %v1913
      %v1978 = vunpack.c.h.b16 %v1913
      %v1979 = vunpack.c.l.b16 %v1914
      %v1980 = vunpack.c.h.b16 %v1914
      %v1981 = vunpack.c.l.b16 %v1915
      %v1982 = vunpack.c.h.b16 %v1915
      %v1983 = vunpack.c.l.b16 %v1916
      %v1984 = vunpack.c.h.b16 %v1916
      %v1985 = vunpack.c.l.b16 %v1917
      %v1986 = vunpack.c.h.b16 %v1917
      %v1987 = vunpack.c.l.b16 %v1918
      %v1988 = vunpack.c.h.b16 %v1918
      %v1989 = vunpack.c.l.b16 %v1919
      %v1990 = vunpack.c.h.b16 %v1919
      %v1991 = vunpack.c.l.b16 %v1920
      %v1992 = vunpack.c.h.b16 %v1920
      %v1993 = vunpack.c.l.b16 %v1921
      %v1994 = vunpack.c.h.b16 %v1921
      %v1995 = vunpack.c.l.b16 %v1922
      %v1996 = vunpack.c.h.b16 %v1922
      %v1997 = vunpack.c.l.b16 %v1923
      %v1998 = vunpack.c.h.b16 %v1923
      %v1999 = vunpack.c.l.b16 %v1924
      %v2000 = vunpack.c.h.b16 %v1924
      %v2001 = vunpack.c.l.b16 %v1925
      %v2002 = vunpack.c.h.b16 %v1925
      %v2003 = vunpack.c.l.b16 %v1926
      %v2004 = vunpack.c.h.b16 %v1926
      %v2005 = vunpack.c.l.b16 %v1927
      %v2006 = vunpack.c.h.b16 %v1927
      %v2007 = vunpack.c.l.b16 %v1928
      %v2008 = vunpack.c.h.b16 %v1928
      %v2009 = vunpack.c.l.b16 %v1929
      %v2010 = vunpack.c.h.b16 %v1929
      %v2011 = vunpack.c.l.b16 %v1930
      %v2012 = vunpack.c.h.b16 %v1930
      %v2013 = vunpack.c.l.b16 %v1931
      %v2014 = vunpack.c.h.b16 %v1931
      %v2015 = vunpack.c.l.b16 %v1932
      %v2016 = vunpack.c.h.b16 %v1932
      %v2017 = vunpack.c.l.b16 %v1933
      %v2018 = vunpack.c.h.b16 %v1933
      %v2019 = vunpack.c.l.b16 %v1934
      %v2020 = vunpack.c.h.b16 %v1934
      %v2021 = vunpack.c.l.b16 %v1935
      %v2022 = vunpack.c.h.b16 %v1935
      %v2023 = vunpack.c.l.b16 %v1936
      %v2024 = vunpack.c.h.b16 %v1936
      %v2025 = vunpack.c.l.b16 %v1937
      %v2026 = vunpack.c.h.b16 %v1937
      %v2027 = vunpack.c.l.b16 %v1938
      %v2028 = vunpack.c.h.b16 %v1938
      %v2029 = vunpack.c.l.b16 %v1939
      %v2030 = vunpack.c.h.b16 %v1939
      %v2031 = vunpack.c.l.b16 %v1940
      %v2032 = vunpack.c.h.b16 %v1940
      %v2033 = vunpack.c.l.b16 %v1941
      %v2034 = vunpack.c.h.b16 %v1941
      %v2035 = vunpack.c.l.b16 %v1942
      %v2036 = vunpack.c.h.b16 %v1942
      %v2037 = vunpack.c.l.b16 %v1943
      %v2038 = vunpack.c.h.b16 %v1943
      %v2039 = vunpack.c.l.b16 %v1944
      %v2040 = vunpack.c.h.b16 %v1944
      %v2041 = vpack.c.b16 %v1979, %v1977
      %v2042 = vpack.c.b16 %v1980, %v1978
      %v2043 = vpack.c.b16 %v1983, %v1981
      %v2044 = vpack.c.b16 %v1984, %v1982
      %v2045 = vpack.c.b16 %v1987, %v1985
      %v2046 = vpack.c.b16 %v1988, %v1986
      %v2047 = vpack.c.b16 %v1991, %v1989
      %v2048 = vpack.c.b16 %v1992, %v1990
      %v2049 = vpack.c.b16 %v1995, %v1993
      %v2050 = vpack.c.b16 %v1996, %v1994
      %v2051 = vpack.c.b16 %v1999, %v1997
      %v2052 = vpack.c.b16 %v2000, %v1998
      %v2053 = vpack.c.b16 %v2003, %v2001
      %v2054 = vpack.c.b16 %v2004, %v2002
      %v2055 = vpack.c.b16 %v2007, %v2005
      %v2056 = vpack.c.b16 %v2008, %v2006
      %v2057 = vpack.c.b16 %v2011, %v2009
      %v2058 = vpack.c.b16 %v2012, %v2010
      %v2059 = vpack.c.b16 %v2015, %v2013
      %v2060 = vpack.c.b16 %v2016, %v2014
      %v2061 = vpack.c.b16 %v2019, %v2017
      %v2062 = vpack.c.b16 %v2020, %v2018
      %v2063 = vpack.c.b16 %v2023, %v2021
      %v2064 = vpack.c.b16 %v2024, %v2022
      %v2065 = vpack.c.b16 %v2027, %v2025
      %v2066 = vpack.c.b16 %v2028, %v2026
      %v2067 = vpack.c.b16 %v2031, %v2029
      %v2068 = vpack.c.b16 %v2032, %v2030
      %v2069 = vpack.c.b16 %v2035, %v2033
      %v2070 = vpack.c.b16 %v2036, %v2034
      %v2071 = vpack.c.b16 %v2039, %v2037
      %v2072 = vpack.c.b16 %v2040, %v2038
      %2105 = vmatprep.subr.bf16.mxu0 %v2056
      %2106 = vmatpush1.bf16.msra.mxu0 %v2055
      %2107 = vmatprep.subr.bf16.mxu0 %v2054
      %2108 = vmatpush1.bf16.msra.mxu0 %v2053
      %2109 = vmatprep.subr.bf16.mxu0 %v2052
      %2110 = vmatpush1.bf16.msra.mxu0 %v2051
      %2111 = vmatprep.subr.bf16.mxu0 %v2050
      %2112 = vmatpush1.bf16.msra.mxu0 %v2049
      %2113 = vmatprep.subr.bf16.mxu0 %v2048
      %2114 = vmatpush1.bf16.msra.mxu0 %v2047
      %2115 = vmatprep.subr.bf16.mxu0 %v2046
      %2116 = vmatpush1.bf16.msra.mxu0 %v2045
      %2117 = vmatprep.subr.bf16.mxu0 %v2044
      %2118 = vmatpush1.bf16.msra.mxu0 %v2043
      %2119 = vmatprep.subr.bf16.mxu0 %v2042
      %2120 = vmatpush1.bf16.msra.mxu0 %v2041
      %2121 = vmatprep.subr.bf16.mxu0 %v2072
      %2122 = vmatpush2.bf16.msra.mxu0 %v2071
      %2123 = vmatprep.subr.bf16.mxu0 %v2070
      %2124 = vmatpush2.bf16.msra.mxu0 %v2069
      %2125 = vmatprep.subr.bf16.mxu0 %v2068
      %2126 = vmatpush2.bf16.msra.mxu0 %v2067
      %2127 = vmatprep.subr.bf16.mxu0 %v2066
      %2128 = vmatpush2.bf16.msra.mxu0 %v2065
      %2129 = vmatprep.subr.bf16.mxu0 %v2064
      %2130 = vmatpush2.bf16.msra.mxu0 %v2063
      %2131 = vmatprep.subr.bf16.mxu0 %v2062
      %2132 = vmatpush2.bf16.msra.mxu0 %v2061
      %2133 = vmatprep.subr.bf16.mxu0 %v2060
      %2134 = vmatpush2.bf16.msra.mxu0 %v2059
      %2135 = vmatprep.subr.bf16.mxu0 %v2058
      %2136 = vmatpush2.bf16.msra.mxu0 %v2057
      %2137 = vmatprep.mubr.bf16.mxu0 %v449
      %2138 = vmatmul.mubr.bf16.gmra.mxu0 %v442
      %v2139 = vpop.f32.mrf.mxu0
      %v2140 = vadd.f32 0.0, %v2139
      %v2141 = vpop.f32.mrf.mxu0
      %v2142 = vadd.f32 0.0, %v2141
      %v2143 = vpop.f32.mrf.mxu0
      %v2144 = vpop.f32.mrf.mxu0
      %2145 = vdwg.mxu0
      %v2146 = vld [vmem:[%s8] sm:$0x3]
      %v2148 = vlaneseq
      %v2149 = vshrl.u32 %v2148, 7
      %v2150 = vsub.s32 0, %v2149
      %v2151 = vrot.slane %v2146, %v2150
      %v2152 = vlaneseq
      %v2153 = vshrl.u32 %v2152, 7
      %v2154 = vsub.s32 1, %v2153
      %v2155 = vrot.slane %v2146, %v2154
      %v2158 = vmul.f32 %v2140, %v2151
      %v2159 = vmul.f32 %v2142, %v2155
      %v2160 = vld [vmem:[%s9] sm:$0x3]
      %v2162 = vlaneseq
      %v2163 = vshrl.u32 %v2162, 7
      %v2164 = vsub.s32 0, %v2163
      %v2165 = vrot.slane %v2160, %v2164
      %v2166 = vlaneseq
      %v2167 = vshrl.u32 %v2166, 7
      %v2168 = vsub.s32 1, %v2167
      %v2169 = vrot.slane %v2160, %v2168
      %v2172 = vadd.f32 %v2158, %v2165
      %v2173 = vadd.f32 %v2159, %v2169
      %v2174 = vadd.f32 %v1911, %v2172
      %v2175 = vadd.f32 %v1912, %v2173
      %v2176 = vmax.f32 %v2174, 0.0
      %v2177 = vmax.f32 %v2175, 0.0
      %v2178 = vpack.c.bf16 %v2176, %v2176
      %v2179 = vpack.c.bf16 %v2177, %v2177
      %v2182 = vunpack.c.l.b16 %v2178
      %v2183 = vunpack.c.l.b16 %v2179
      %v2184 = vpack.c.b16 %v2183, %v2182
      %2186 = vst [vmem:[%s359] sm:$0xff] %v2184
      %p2187 = scmp.lt.s32.totalorder %s21, 1
      %s2188 = scalar_select %p2187, %s21, 1
      %s2189 = smul.addr %s2188, 2
      %s2190 = smul.addr %s2189, 4
      %s2191 = scalar_lea.vmem %s10, %s2190
      // Predicated region
      $region61: #{_lambda_.1} parent=59 // pred_check
        %p2192 = pneg %p254
      $region62: #{_lambda_.1} parent=59 // pred_check_branch
        %2194 = sbr.rel (%p2192) target = $region64
      $region63: #{_lambda_.1} parent=59 // pred_region
        _
      $region64: #{_lambda_.1} parent=59 // pred_fallthru
        _
    $region60: #{_lambda_.1} parent=5 // pred_fallthru
      _
    %p2195 = scmp.le.s32.totalorder 2, %s16
    // Predicated region
    $region65: #{_lambda_.1} parent=5 // pred_check
      %p2196 = pneg %p2195
    $region66: #{_lambda_.1} parent=5 // pred_check_branch
      %2198 = sbr.rel (%p2196) target = $region68
    $region67: #{_lambda_.1} parent=5 // pred_region
      %s2199 = ssub.s32 %s16, 2
      // Predicated region
      $region69: #{_lambda_.1} parent=67 // pred_check
        %p2200 = pneg %p260
      $region70: #{_lambda_.1} parent=67 // pred_check_branch
        %2202 = sbr.rel (%p2200) target = $region72
      $region71: #{_lambda_.1} parent=67 // pred_region
        %p2203 = scmp.lt.s32.totalorder %s22, 1
        %s2204 = scalar_select %p2203, %s22, 1
        %s2205 = smul.addr %s2204, 2
        %s2206 = smul.addr %s2205, 4
        %s2207 = scalar_lea.vmem %s10, %s2206
      $region72: #{_lambda_.1} parent=67 // pred_fallthru
        _
    $region68: #{_lambda_.1} parent=5 // pred_fallthru
      _
  $region6: #{_lambda_.1} parent=0 // loop_footer
    %s20 = sadd.s32 1, %s16
  $region7: #{_lambda_.1} parent=0 // loop_footer_branch
    %15 = sbr.rel target = $region3
  $region8: #{_lambda_.1} parent=0 // loop_exit
    _

</llo_original>
